<compile_context>
chip_gen: v5e
topology: v5e:2x2
jax: 0.10.0
libtpu: 0.0.40
codegen_flags: <defaults>
</compile_context>

<pallas_src>
import numpy as np
import jax
import jax.numpy as jnp
from jax.experimental import pallas as pl
from jax.experimental.pallas import tpu as pltpu

# ---------------- static config (small shapes consistent with the module) ----
B = 2
H = W = 32            # image spatial size
PATCH = 4             # surrogate backbone: stride-4 patchify (FPN level '0' stride)
HF = H // PATCH       # 8  feature-map height
WF = W // PATCH       # 8  feature-map width
C_FEAT = 256          # backbone.out_channels
NUM_V = 5             # len(SPINAL_VERTEBRA_ID)
NUM_D = 6             # len(SPINAL_DISC_ID)
NUM_PTS = NUM_V + NUM_D   # 11
PIXEL_MEAN = 0.5
PIXEL_STD = 1.0
PP = PATCH * PATCH        # 16
HW_IN = HF * WF           # 64
HW_OUT = H * W            # 1024


# ---------------- bilinear(align_corners=True) as a constant matrix ----------
def _bilinear_matrix(out_size, in_size):
    pos = np.arange(out_size, dtype=np.float64) * (in_size - 1) / max(out_size - 1, 1)
    lo = np.clip(np.floor(pos).astype(np.int64), 0, in_size - 2)
    frac = (pos - lo).astype(np.float32)
    m = np.zeros((out_size, in_size), np.float32)
    m[np.arange(out_size), lo] += 1.0 - frac
    m[np.arange(out_size), lo + 1] += frac
    return m


_LH = _bilinear_matrix(H, HF)                    # (32, 8)
_LW = _bilinear_matrix(W, WF)                    # (32, 8)
# U[y*W + x, h*WF + w] = LH[y, h] * LW[x, w];  UT is lane-dense (64, 1024).
# Kept in f32 (bf16 halves the footprint but can flip argmax on near-ties).
_UT = np.ascontiguousarray(np.kron(_LH, _LW).T.astype(np.float32))   # (64, 1024)


# ---------------- the fused kernel: whole batch in ONE invocation ------------
def _fused_forward_kernel(p_ref, wb_ref, bb_ref, fc_ref, fcb_ref, ut_ref, idx_ref):
    # _preprocess: (x - mean) / std  (3-channel expand already folded into wb)
    x = (p_ref[...] - PIXEL_MEAN) * (1.0 / PIXEL_STD)                      # (B*16, 64)
    # surrogate backbone: 4x4 / stride-4 patchify conv -> ReLU (block-diag over batch)
    feat = jnp.dot(wb_ref[...], x, preferred_element_type=jnp.float32)     # (B*256, 64)
    feat = jnp.maximum(feat + bb_ref[...], 0.0)
    # self.fc: 1x1 conv 256 -> 11 (block-diag over batch)
    scores = jnp.dot(fc_ref[...], feat,
                     preferred_element_type=jnp.float32) + fcb_ref[...]    # (B*11, 64)
    # interpolate(bilinear, align_corners=True): ONE lane-dense matmul for all
    # batches/points.
    up = jnp.dot(scores, ut_ref[...], preferred_element_type=jnp.float32)  # (B*11, 1024)
    # heat_maps = scores.sigmoid() is monotonic -> skipped before argmax.
    # TODO(synk): SpinalModelBase source unavailable; assumed flatten-argmax with
    # first-index tie-break, coords returned as (y, x).
    rowmax = jnp.max(up, axis=-1, keepdims=True)                           # (B*11, 1)
    lane = jax.lax.broadcasted_iota(jnp.int32, up.shape, 1)                # (B*11, 1024)
    idx_ref[...] = jnp.min(jnp.where(up >= rowmax, lane, HW_OUT),
                           axis=-1, keepdims=True)                         # (B*11, 1)


# ---------------- parameters ----------------
def init_params(key, batch=B):
    ks = jax.random.split(key, 3)

    def w(k, shape, fan_in):
        return jax.random.normal(k, shape, jnp.float32) / jnp.sqrt(float(fan_in))

    # TODO(synk): BackboneWithFPN (ResNet + FPN) is external and not reproducible
    # here; replaced by a single 4x4 / stride-4 patchify conv (3 -> 256) + ReLU
    # standing in for feature_pyramids['0'].
    backbone_w = w(ks[0], (3 * PP, C_FEAT), 3 * PP)
    backbone_b = jnp.zeros((C_FEAT,), jnp.float32)
    fc_w = w(ks[1], (C_FEAT, NUM_PTS), C_FEAT)      # Conv2d(256, 11, kernel_size=1)
    fc_b = w(ks[2], (NUM_PTS,), 1.0)

    # images.expand(-1, 3, -1, -1): all 3 channels identical -> summing the three
    # (16, 256) channel blocks of the weight is exact.
    w_sum = backbone_w[:PP] + backbone_w[PP:2 * PP] + backbone_w[2 * PP:]   # (16, 256)
    wbT = w_sum.T                                                            # (256, 16)
    fcT = fc_w.T                                                             # (11, 256)

    # Block-diagonal stacking over batch -> whole forward is one grid step with
    # the batch carried in the sublane (M) dimension; no in-kernel relayout.
    wb_bd = jnp.zeros((batch * C_FEAT, batch * PP), jnp.float32)
    fc_bd = jnp.zeros((batch * NUM_PTS, batch * C_FEAT), jnp.float32)
    for i in range(batch):
        wb_bd = wb_bd.at[i * C_FEAT:(i + 1) * C_FEAT, i * PP:(i + 1) * PP].set(wbT)
        fc_bd = fc_bd.at[i * NUM_PTS:(i + 1) * NUM_PTS,
                         i * C_FEAT:(i + 1) * C_FEAT].set(fcT)
    bb = jnp.tile(backbone_b.reshape(C_FEAT, 1), (batch, 1))        # (B*256, 1)
    fcb = jnp.tile(fc_b.reshape(NUM_PTS, 1), (batch, 1))            # (B*11, 1)

    return {
        "wb_bd": wb_bd,                 # (B*256, B*16)
        "bb": bb,                       # (B*256, 1)
        "fc_bd": fc_bd,                 # (B*11, B*256)
        "fcb": fcb,                     # (B*11, 1)
        "ut": jnp.asarray(_UT),         # (64, 1024)
    }


# ---------------- forward (eval mode) ----------------
@jax.jit
def keypoint_forward(images, params):
    """Eval-mode KeyPointModel.forward: returns (vertebra_coords, disc_coords)."""
    b = images.shape[0]
    # Glue: stride-4 patchify + batch-stacked transpose feeding the kernel.
    # Kept in the wrapper (one tiny XLA fusion over 8 KiB) because the patch
    # relayout mixes row/column indices and has no cheap in-kernel equivalent;
    # cost_estimate below lets XLA overlap it with the pallas_call.
    x = images[:, 0]                                                    # (B, 32, 32)
    p = x.reshape(b, HF, PATCH, WF, PATCH).transpose(0, 1, 3, 2, 4)     # (B,8,8,4,4)
    p = p.reshape(b, HW_IN, PP)                                         # (B, 64, 16)
    pT = p.transpose(0, 2, 1).reshape(b * PP, HW_IN)                    # (B*16, 64)

    # NOTE: the inter_layer1 + classifie_vertebra/classeifie_disc branch is dead
    # in eval forward (its outputs are discarded when return_more=False) -> removed.
    vmem = pl.BlockSpec(memory_space=pltpu.MemorySpace.VMEM)
    flat_idx = pl.pallas_call(
        _fused_forward_kernel,
        out_shape=jax.ShapeDtypeStruct((b * NUM_PTS, 1), jnp.int32),
        in_specs=[vmem] * 6,
        out_specs=vmem,
        cost_estimate=pl.CostEstimate(
            flops=6_500_000, transcendentals=0, bytes_accessed=380_000),
    )(pT, params["wb_bd"], params["bb"], params["fc_bd"], params["fcb"],
      params["ut"])

    # y = idx // W, x = idx % W done here (strength-reduced; W = 32).
    idx = flat_idx.reshape(b, NUM_PTS)
    ycoord = idx >> 5
    xcoord = idx & 31
    coords = jnp.stack([ycoord, xcoord], axis=-1)     # (B, 11, 2)
    vertebra_coords = coords[:, :NUM_V]               # (B, 5, 2)
    disc_coords = coords[:, NUM_V:]                   # (B, 6, 2)
    return vertebra_coords, disc_coords


if __name__ == "__main__":
    key = jax.random.PRNGKey(0)
    pkey, xkey = jax.random.split(key)
    params = init_params(pkey)
    images = jax.random.uniform(xkey, (B, 1, H, W), dtype=jnp.float32)

    vertebra_coords, disc_coords = keypoint_forward(images, params)
    jax.block_until_ready((vertebra_coords, disc_coords))

    assert vertebra_coords.shape == (B, NUM_V, 2)
    assert disc_coords.shape == (B, NUM_D, 2)
    print("KERNEL_OK")
</pallas_src>

<mosaic_0001>
module attributes {stable_mosaic.version = 11 : i64} {
  func.func @_fused_forward_kernel(%arg0: memref<32x64xf32, #tpu.memory_space<vmem>>, %arg1: memref<512x32xf32, #tpu.memory_space<vmem>>, %arg2: memref<512x1xf32, #tpu.memory_space<vmem>>, %arg3: memref<22x512xf32, #tpu.memory_space<vmem>>, %arg4: memref<22x1xf32, #tpu.memory_space<vmem>>, %arg5: memref<64x1024xf32, #tpu.memory_space<vmem>>, %arg6: memref<22x1xi32, #tpu.memory_space<vmem>>) attributes {dimension_semantics = [], scalar_prefetch = 0 : i64, scratch_operands = 0 : i64, tpu.core_type = #tpu.core_type<tc>} {
    %c0 = arith.constant 0 : index
    %c0_0 = arith.constant 0 : index
    %0 = vector.load %arg0[%c0, %c0_0] : memref<32x64xf32, #tpu.memory_space<vmem>>, vector<32x64xf32>
    %cst = arith.constant 5.000000e-01 : f32
    %1 = vector.broadcast %cst : f32 to vector<32x64xf32>
    %2 = arith.subf %0, %1 : vector<32x64xf32>
    %cst_1 = arith.constant 1.000000e+00 : f32
    %3 = vector.broadcast %cst_1 : f32 to vector<32x64xf32>
    %4 = arith.mulf %2, %3 : vector<32x64xf32>
    %c0_2 = arith.constant 0 : index
    %c0_3 = arith.constant 0 : index
    %5 = vector.load %arg1[%c0_2, %c0_3] : memref<512x32xf32, #tpu.memory_space<vmem>>, vector<512x32xf32>
    %cst_4 = arith.constant dense<0.000000e+00> : vector<512x64xf32>
    %6 = tpu.matmul %5, %4, %cst_4 {dimension_numbers = #tpu.dot_dimension_numbers<[1], [0], [0], [1], [0, 0, 1, 1], [], []>} : vector<512x32xf32>, vector<32x64xf32>, vector<512x64xf32> -> vector<512x64xf32>
    %c0_5 = arith.constant 0 : index
    %c0_6 = arith.constant 0 : index
    %7 = vector.load %arg2[%c0_5, %c0_6] : memref<512x1xf32, #tpu.memory_space<vmem>>, vector<512x1xf32>
    %8 = vector.broadcast %7 : vector<512x1xf32> to vector<512x64xf32>
    %9 = arith.addf %6, %8 : vector<512x64xf32>
    %cst_7 = arith.constant 0.000000e+00 : f32
    %10 = vector.broadcast %cst_7 : f32 to vector<512x64xf32>
    %11 = arith.maximumf %9, %10 : vector<512x64xf32>
    %c0_8 = arith.constant 0 : index
    %c0_9 = arith.constant 0 : index
    %12 = vector.load %arg3[%c0_8, %c0_9] : memref<22x512xf32, #tpu.memory_space<vmem>>, vector<22x512xf32>
    %cst_10 = arith.constant dense<0.000000e+00> : vector<22x64xf32>
    %13 = tpu.matmul %12, %11, %cst_10 {dimension_numbers = #tpu.dot_dimension_numbers<[1], [0], [0], [1], [0, 0, 1, 1], [], []>} : vector<22x512xf32>, vector<512x64xf32>, vector<22x64xf32> -> vector<22x64xf32>
    %c0_11 = arith.constant 0 : index
    %c0_12 = arith.constant 0 : index
    %14 = vector.load %arg4[%c0_11, %c0_12] : memref<22x1xf32, #tpu.memory_space<vmem>>, vector<22x1xf32>
    %15 = vector.broadcast %14 : vector<22x1xf32> to vector<22x64xf32>
    %16 = arith.addf %13, %15 : vector<22x64xf32>
    %c0_13 = arith.constant 0 : index
    %c0_14 = arith.constant 0 : index
    %17 = vector.load %arg5[%c0_13, %c0_14] : memref<64x1024xf32, #tpu.memory_space<vmem>>, vector<64x1024xf32>
    %cst_15 = arith.constant dense<0.000000e+00> : vector<22x1024xf32>
    %18 = tpu.matmul %16, %17, %cst_15 {dimension_numbers = #tpu.dot_dimension_numbers<[1], [0], [0], [1], [0, 0, 1, 1], [], []>} : vector<22x64xf32>, vector<64x1024xf32>, vector<22x1024xf32> -> vector<22x1024xf32>
    %cst_16 = arith.constant dense<0xFF800000> : vector<22xf32>
    %19 = vector.multi_reduction <maximumf>, %18, %cst_16 [1] : vector<22x1024xf32> to vector<22xf32>
    %20 = vector.shape_cast %19 : vector<22xf32> to vector<22x1xf32>
    %21 = tpu.iota {dimensions = array<i32: 1>} : vector<22x1024xi32>
    %22 = vector.broadcast %20 : vector<22x1xf32> to vector<22x1024xf32>
    %23 = arith.cmpf oge, %18, %22 : vector<22x1024xf32>
    %c1024_i32 = arith.constant 1024 : i32
    %24 = vector.broadcast %c1024_i32 : i32 to vector<22x1024xi32>
    %25 = arith.select %23, %21, %24 : vector<22x1024xi1>, vector<22x1024xi32>
    %cst_17 = arith.constant dense<2147483647> : vector<22xi32>
    %26 = vector.multi_reduction <minsi>, %25, %cst_17 [1] : vector<22x1024xi32> to vector<22xi32>
    %27 = vector.shape_cast %26 : vector<22xi32> to vector<22x1xi32>
    %c0_18 = arith.constant 0 : index
    %c0_19 = arith.constant 0 : index
    %28 = vector.load %arg6[%c0_18, %c0_19] : memref<22x1xi32, #tpu.memory_space<vmem>>, vector<22x1xi32>
    tpu.vector_store %arg6[%c0_18, %c0_19], %27 {strides = array<i32>} : memref<22x1xi32, #tpu.memory_space<vmem>>, vector<22x1xi32>,
    return
  }
}

</mosaic_0001>

<llo_original>
// kernel: squeeze.1
$region0: #{squeeze.1}
  %s0 = inlined_call_operand.hbm [shape: f32[2,1,32,32], index: 0, kind: input, shape index: {}]
  %s1 = inlined_call_operand.vmem [shape: f32[2,8,4,8,4], index: 1, kind: output, shape index: {}]
  $region1: #{squeeze.1} parent=0
    #allocation0 [shape = 'u8[32768]{0}', space=vmem, size = 0x8000, scoped, tag = 'operand span for operand 0']
    #allocation1 [shape = 's32[1]{0}', space=sflag, size = 0x4, scoped, tag = 'scoped memory for squeeze.1']
    %2 = vsyncpa [#allocation1], 0
    %4 = vsyncadd [#allocation1], 0
    %s6 = sshll.u32 %s0, 4
    %s7 = int_to_ptr.hbm [resolvable:$true] %s6
    %s8 = sshll.u32 [#allocation0], 4
    %s9 = int_to_ptr.vmem [resolvable:$true] %s8
    %11 = dma.hbm_to_vmem [thread:$0]  %s7, 1024, %s9, [#allocation1]
    %13 = dma.done [#allocation1], 1024
    %v14 = vld [vmem:[#allocation0] sm:$0xff]
    %vm15 = vcmask 31744
    %16 = vst.msk [vmem:[%s1] ss:$8 sm:$0xf] %vm15, %v14
    %17 = vst.msk [vmem:[%s1] ss:$8 sm:$0xf0] %vm15, %v14
    %s18 = scalar_lea.vmem [#allocation0], 8
    %v19 = vld [vmem:[%s18] sm:$0xff]
    %vm20 = vcmask 31744
    %s21 = scalar_lea.vmem %s1, 64
    %22 = vst.msk [vmem:[%s21] ss:$8 sm:$0xf] %vm20, %v19
    %s23 = scalar_lea.vmem %s1, 64
    %24 = vst.msk [vmem:[%s23] ss:$8 sm:$0xf0] %vm20, %v19
    %s25 = scalar_lea.vmem [#allocation0], 16
    %v26 = vld [vmem:[%s25] sm:$0xff]
    %vm27 = vcmask 31744
    %s28 = scalar_lea.vmem %s1, 128
    %29 = vst.msk [vmem:[%s28] ss:$8 sm:$0xf] %vm27, %v26
    %s30 = scalar_lea.vmem %s1, 128
    %31 = vst.msk [vmem:[%s30] ss:$8 sm:$0xf0] %vm27, %v26
    %s32 = scalar_lea.vmem [#allocation0], 24
    %v33 = vld [vmem:[%s32] sm:$0xff]
    %vm34 = vcmask 31744
    %s35 = scalar_lea.vmem %s1, 192
    %36 = vst.msk [vmem:[%s35] ss:$8 sm:$0xf] %vm34, %v33
    %s37 = scalar_lea.vmem %s1, 192
    %38 = vst.msk [vmem:[%s37] ss:$8 sm:$0xf0] %vm34, %v33
    %s39 = scalar_lea.vmem [#allocation0], 32
    %v40 = vld [vmem:[%s39] sm:$0xff]
    %vm41 = vcmask 31744
    %s42 = scalar_lea.vmem %s1, 256
    %43 = vst.msk [vmem:[%s42] ss:$8 sm:$0xf] %vm41, %v40
    %s44 = scalar_lea.vmem %s1, 256
    %45 = vst.msk [vmem:[%s44] ss:$8 sm:$0xf0] %vm41, %v40
    %s46 = scalar_lea.vmem [#allocation0], 40
    %v47 = vld [vmem:[%s46] sm:$0xff]
    %vm48 = vcmask 31744
    %s49 = scalar_lea.vmem %s1, 320
    %50 = vst.msk [vmem:[%s49] ss:$8 sm:$0xf] %vm48, %v47
    %s51 = scalar_lea.vmem %s1, 320
    %52 = vst.msk [vmem:[%s51] ss:$8 sm:$0xf0] %vm48, %v47
    %s53 = scalar_lea.vmem [#allocation0], 48
    %v54 = vld [vmem:[%s53] sm:$0xff]
    %vm55 = vcmask 31744
    %s56 = scalar_lea.vmem %s1, 384
    %57 = vst.msk [vmem:[%s56] ss:$8 sm:$0xf] %vm55, %v54
    %s58 = scalar_lea.vmem %s1, 384
    %59 = vst.msk [vmem:[%s58] ss:$8 sm:$0xf0] %vm55, %v54
    %s60 = scalar_lea.vmem [#allocation0], 56
    %v61 = vld [vmem:[%s60] sm:$0xff]
    %vm62 = vcmask 31744
    %s63 = scalar_lea.vmem %s1, 448
    %64 = vst.msk [vmem:[%s63] ss:$8 sm:$0xf] %vm62, %v61
    %s65 = scalar_lea.vmem %s1, 448
    %66 = vst.msk [vmem:[%s65] ss:$8 sm:$0xf0] %vm62, %v61
    %v67 = vld [vmem:[#allocation0] sm:$0xff]
    %68 = vrot.lane.b32.xlu0 %v67, 124
    %v69 = vpop.permute.xlu0 %68
    %vm70 = vcmask 31744
    %s71 = scalar_lea.vmem %s1, 1
    %72 = vst.msk [vmem:[%s71] ss:$8 sm:$0xf] %vm70, %v69
    %s73 = scalar_lea.vmem %s1, 1
    %74 = vst.msk [vmem:[%s73] ss:$8 sm:$0xf0] %vm70, %v69
    %s75 = scalar_lea.vmem [#allocation0], 8
    %v76 = vld [vmem:[%s75] sm:$0xff]
    %77 = vrot.lane.b32.xlu0 %v76, 124
    %v78 = vpop.permute.xlu0 %77
    %vm79 = vcmask 31744
    %s80 = scalar_lea.vmem %s1, 65
    %81 = vst.msk [vmem:[%s80] ss:$8 sm:$0xf] %vm79, %v78
    %s82 = scalar_lea.vmem %s1, 65
    %83 = vst.msk [vmem:[%s82] ss:$8 sm:$0xf0] %vm79, %v78
    %s84 = scalar_lea.vmem [#allocation0], 16
    %v85 = vld [vmem:[%s84] sm:$0xff]
    %86 = vrot.lane.b32.xlu0 %v85, 124
    %v87 = vpop.permute.xlu0 %86
    %vm88 = vcmask 31744
    %s89 = scalar_lea.vmem %s1, 129
    %90 = vst.msk [vmem:[%s89] ss:$8 sm:$0xf] %vm88, %v87
    %s91 = scalar_lea.vmem %s1, 129
    %92 = vst.msk [vmem:[%s91] ss:$8 sm:$0xf0] %vm88, %v87
    %s93 = scalar_lea.vmem [#allocation0], 24
    %v94 = vld [vmem:[%s93] sm:$0xff]
    %95 = vrot.lane.b32.xlu0 %v94, 124
    %v96 = vpop.permute.xlu0 %95
    %vm97 = vcmask 31744
    %s98 = scalar_lea.vmem %s1, 193
    %99 = vst.msk [vmem:[%s98] ss:$8 sm:$0xf] %vm97, %v96
    %s100 = scalar_lea.vmem %s1, 193
    %101 = vst.msk [vmem:[%s100] ss:$8 sm:$0xf0] %vm97, %v96
    %s102 = scalar_lea.vmem [#allocation0], 32
    %v103 = vld [vmem:[%s102] sm:$0xff]
    %104 = vrot.lane.b32.xlu0 %v103, 124
    %v105 = vpop.permute.xlu0 %104
    %vm106 = vcmask 31744
    %s107 = scalar_lea.vmem %s1, 257
    %108 = vst.msk [vmem:[%s107] ss:$8 sm:$0xf] %vm106, %v105
    %s109 = scalar_lea.vmem %s1, 257
    %110 = vst.msk [vmem:[%s109] ss:$8 sm:$0xf0] %vm106, %v105
    %s111 = scalar_lea.vmem [#allocation0], 40
    %v112 = vld [vmem:[%s111] sm:$0xff]
    %113 = vrot.lane.b32.xlu0 %v112, 124
    %v114 = vpop.permute.xlu0 %113
    %vm115 = vcmask 31744
    %s116 = scalar_lea.vmem %s1, 321
    %117 = vst.msk [vmem:[%s116] ss:$8 sm:$0xf] %vm115, %v114
    %s118 = scalar_lea.vmem %s1, 321
    %119 = vst.msk [vmem:[%s118] ss:$8 sm:$0xf0] %vm115, %v114
    %s120 = scalar_lea.vmem [#allocation0], 48
    %v121 = vld [vmem:[%s120] sm:$0xff]
    %122 = vrot.lane.b32.xlu0 %v121, 124
    %v123 = vpop.permute.xlu0 %122
    %vm124 = vcmask 31744
    %s125 = scalar_lea.vmem %s1, 385
    %126 = vst.msk [vmem:[%s125] ss:$8 sm:$0xf] %vm124, %v123
    %s127 = scalar_lea.vmem %s1, 385
    %128 = vst.msk [vmem:[%s127] ss:$8 sm:$0xf0] %vm124, %v123
    %s129 = scalar_lea.vmem [#allocation0], 56
    %v130 = vld [vmem:[%s129] sm:$0xff]
    %131 = vrot.lane.b32.xlu0 %v130, 124
    %v132 = vpop.permute.xlu0 %131
    %vm133 = vcmask 31744
    %s134 = scalar_lea.vmem %s1, 449
    %135 = vst.msk [vmem:[%s134] ss:$8 sm:$0xf] %vm133, %v132
    %s136 = scalar_lea.vmem %s1, 449
    %137 = vst.msk [vmem:[%s136] ss:$8 sm:$0xf0] %vm133, %v132
    %v138 = vld [vmem:[#allocation0] sm:$0xff]
    %139 = vrot.lane.b32.xlu0 %v138, 120
    %v140 = vpop.permute.xlu0 %139
    %vm141 = vcmask 31744
    %s142 = scalar_lea.vmem %s1, 2
    %143 = vst.msk [vmem:[%s142] ss:$8 sm:$0xf] %vm141, %v140
    %s144 = scalar_lea.vmem %s1, 2
    %145 = vst.msk [vmem:[%s144] ss:$8 sm:$0xf0] %vm141, %v140
    %s146 = scalar_lea.vmem [#allocation0], 8
    %v147 = vld [vmem:[%s146] sm:$0xff]
    %148 = vrot.lane.b32.xlu0 %v147, 120
    %v149 = vpop.permute.xlu0 %148
    %vm150 = vcmask 31744
    %s151 = scalar_lea.vmem %s1, 66
    %152 = vst.msk [vmem:[%s151] ss:$8 sm:$0xf] %vm150, %v149
    %s153 = scalar_lea.vmem %s1, 66
    %154 = vst.msk [vmem:[%s153] ss:$8 sm:$0xf0] %vm150, %v149
    %s155 = scalar_lea.vmem [#allocation0], 16
    %v156 = vld [vmem:[%s155] sm:$0xff]
    %157 = vrot.lane.b32.xlu0 %v156, 120
    %v158 = vpop.permute.xlu0 %157
    %vm159 = vcmask 31744
    %s160 = scalar_lea.vmem %s1, 130
    %161 = vst.msk [vmem:[%s160] ss:$8 sm:$0xf] %vm159, %v158
    %s162 = scalar_lea.vmem %s1, 130
    %163 = vst.msk [vmem:[%s162] ss:$8 sm:$0xf0] %vm159, %v158
    %s164 = scalar_lea.vmem [#allocation0], 24
    %v165 = vld [vmem:[%s164] sm:$0xff]
    %166 = vrot.lane.b32.xlu0 %v165, 120
    %v167 = vpop.permute.xlu0 %166
    %vm168 = vcmask 31744
    %s169 = scalar_lea.vmem %s1, 194
    %170 = vst.msk [vmem:[%s169] ss:$8 sm:$0xf] %vm168, %v167
    %s171 = scalar_lea.vmem %s1, 194
    %172 = vst.msk [vmem:[%s171] ss:$8 sm:$0xf0] %vm168, %v167
    %s173 = scalar_lea.vmem [#allocation0], 32
    %v174 = vld [vmem:[%s173] sm:$0xff]
    %175 = vrot.lane.b32.xlu0 %v174, 120
    %v176 = vpop.permute.xlu0 %175
    %vm177 = vcmask 31744
    %s178 = scalar_lea.vmem %s1, 258
    %179 = vst.msk [vmem:[%s178] ss:$8 sm:$0xf] %vm177, %v176
    %s180 = scalar_lea.vmem %s1, 258
    %181 = vst.msk [vmem:[%s180] ss:$8 sm:$0xf0] %vm177, %v176
    %s182 = scalar_lea.vmem [#allocation0], 40
    %v183 = vld [vmem:[%s182] sm:$0xff]
    %184 = vrot.lane.b32.xlu0 %v183, 120
    %v185 = vpop.permute.xlu0 %184
    %vm186 = vcmask 31744
    %s187 = scalar_lea.vmem %s1, 322
    %188 = vst.msk [vmem:[%s187] ss:$8 sm:$0xf] %vm186, %v185
    %s189 = scalar_lea.vmem %s1, 322
    %190 = vst.msk [vmem:[%s189] ss:$8 sm:$0xf0] %vm186, %v185
    %s191 = scalar_lea.vmem [#allocation0], 48
    %v192 = vld [vmem:[%s191] sm:$0xff]
    %193 = vrot.lane.b32.xlu0 %v192, 120
    %v194 = vpop.permute.xlu0 %193
    %vm195 = vcmask 31744
    %s196 = scalar_lea.vmem %s1, 386
    %197 = vst.msk [vmem:[%s196] ss:$8 sm:$0xf] %vm195, %v194
    %s198 = scalar_lea.vmem %s1, 386
    %199 = vst.msk [vmem:[%s198] ss:$8 sm:$0xf0] %vm195, %v194
    %s200 = scalar_lea.vmem [#allocation0], 56
    %v201 = vld [vmem:[%s200] sm:$0xff]
    %202 = vrot.lane.b32.xlu0 %v201, 120
    %v203 = vpop.permute.xlu0 %202
    %vm204 = vcmask 31744
    %s205 = scalar_lea.vmem %s1, 450
    %206 = vst.msk [vmem:[%s205] ss:$8 sm:$0xf] %vm204, %v203
    %s207 = scalar_lea.vmem %s1, 450
    %208 = vst.msk [vmem:[%s207] ss:$8 sm:$0xf0] %vm204, %v203
    %v209 = vld [vmem:[#allocation0] sm:$0xff]
    %210 = vrot.lane.b32.xlu0 %v209, 116
    %v211 = vpop.permute.xlu0 %210
    %vm212 = vcmask 31744
    %s213 = scalar_lea.vmem %s1, 3
    %214 = vst.msk [vmem:[%s213] ss:$8 sm:$0xf] %vm212, %v211
    %s215 = scalar_lea.vmem %s1, 3
    %216 = vst.msk [vmem:[%s215] ss:$8 sm:$0xf0] %vm212, %v211
    %s217 = scalar_lea.vmem [#allocation0], 8
    %v218 = vld [vmem:[%s217] sm:$0xff]
    %219 = vrot.lane.b32.xlu0 %v218, 116
    %v220 = vpop.permute.xlu0 %219
    %vm221 = vcmask 31744
    %s222 = scalar_lea.vmem %s1, 67
    %223 = vst.msk [vmem:[%s222] ss:$8 sm:$0xf] %vm221, %v220
    %s224 = scalar_lea.vmem %s1, 67
    %225 = vst.msk [vmem:[%s224] ss:$8 sm:$0xf0] %vm221, %v220
    %s226 = scalar_lea.vmem [#allocation0], 16
    %v227 = vld [vmem:[%s226] sm:$0xff]
    %228 = vrot.lane.b32.xlu0 %v227, 116
    %v229 = vpop.permute.xlu0 %228
    %vm230 = vcmask 31744
    %s231 = scalar_lea.vmem %s1, 131
    %232 = vst.msk [vmem:[%s231] ss:$8 sm:$0xf] %vm230, %v229
    %s233 = scalar_lea.vmem %s1, 131
    %234 = vst.msk [vmem:[%s233] ss:$8 sm:$0xf0] %vm230, %v229
    %s235 = scalar_lea.vmem [#allocation0], 24
    %v236 = vld [vmem:[%s235] sm:$0xff]
    %237 = vrot.lane.b32.xlu0 %v236, 116
    %v238 = vpop.permute.xlu0 %237
    %vm239 = vcmask 31744
    %s240 = scalar_lea.vmem %s1, 195
    %241 = vst.msk [vmem:[%s240] ss:$8 sm:$0xf] %vm239, %v238
    %s242 = scalar_lea.vmem %s1, 195
    %243 = vst.msk [vmem:[%s242] ss:$8 sm:$0xf0] %vm239, %v238
    %s244 = scalar_lea.vmem [#allocation0], 32
    %v245 = vld [vmem:[%s244] sm:$0xff]
    %246 = vrot.lane.b32.xlu0 %v245, 116
    %v247 = vpop.permute.xlu0 %246
    %vm248 = vcmask 31744
    %s249 = scalar_lea.vmem %s1, 259
    %250 = vst.msk [vmem:[%s249] ss:$8 sm:$0xf] %vm248, %v247
    %s251 = scalar_lea.vmem %s1, 259
    %252 = vst.msk [vmem:[%s251] ss:$8 sm:$0xf0] %vm248, %v247
    %s253 = scalar_lea.vmem [#allocation0], 40
    %v254 = vld [vmem:[%s253] sm:$0xff]
    %255 = vrot.lane.b32.xlu0 %v254, 116
    %v256 = vpop.permute.xlu0 %255
    %vm257 = vcmask 31744
    %s258 = scalar_lea.vmem %s1, 323
    %259 = vst.msk [vmem:[%s258] ss:$8 sm:$0xf] %vm257, %v256
    %s260 = scalar_lea.vmem %s1, 323
    %261 = vst.msk [vmem:[%s260] ss:$8 sm:$0xf0] %vm257, %v256
    %s262 = scalar_lea.vmem [#allocation0], 48
    %v263 = vld [vmem:[%s262] sm:$0xff]
    %264 = vrot.lane.b32.xlu0 %v263, 116
    %v265 = vpop.permute.xlu0 %264
    %vm266 = vcmask 31744
    %s267 = scalar_lea.vmem %s1, 387
    %268 = vst.msk [vmem:[%s267] ss:$8 sm:$0xf] %vm266, %v265
    %s269 = scalar_lea.vmem %s1, 387
    %270 = vst.msk [vmem:[%s269] ss:$8 sm:$0xf0] %vm266, %v265
    %s271 = scalar_lea.vmem [#allocation0], 56
    %v272 = vld [vmem:[%s271] sm:$0xff]
    %273 = vrot.lane.b32.xlu0 %v272, 116
    %v274 = vpop.permute.xlu0 %273
    %vm275 = vcmask 31744
    %s276 = scalar_lea.vmem %s1, 451
    %277 = vst.msk [vmem:[%s276] ss:$8 sm:$0xf] %vm275, %v274
    %s278 = scalar_lea.vmem %s1, 451
    %279 = vst.msk [vmem:[%s278] ss:$8 sm:$0xf0] %vm275, %v274
    %v280 = vld [vmem:[#allocation0] sm:$0xff]
    %281 = vrot.lane.b32.xlu0 %v280, 112
    %v282 = vpop.permute.xlu0 %281
    %vm283 = vcmask 31744
    %s284 = scalar_lea.vmem %s1, 4
    %285 = vst.msk [vmem:[%s284] ss:$8 sm:$0xf] %vm283, %v282
    %s286 = scalar_lea.vmem %s1, 4
    %287 = vst.msk [vmem:[%s286] ss:$8 sm:$0xf0] %vm283, %v282
    %s288 = scalar_lea.vmem [#allocation0], 8
    %v289 = vld [vmem:[%s288] sm:$0xff]
    %290 = vrot.lane.b32.xlu0 %v289, 112
    %v291 = vpop.permute.xlu0 %290
    %vm292 = vcmask 31744
    %s293 = scalar_lea.vmem %s1, 68
    %294 = vst.msk [vmem:[%s293] ss:$8 sm:$0xf] %vm292, %v291
    %s295 = scalar_lea.vmem %s1, 68
    %296 = vst.msk [vmem:[%s295] ss:$8 sm:$0xf0] %vm292, %v291
    %s297 = scalar_lea.vmem [#allocation0], 16
    %v298 = vld [vmem:[%s297] sm:$0xff]
    %299 = vrot.lane.b32.xlu0 %v298, 112
    %v300 = vpop.permute.xlu0 %299
    %vm301 = vcmask 31744
    %s302 = scalar_lea.vmem %s1, 132
    %303 = vst.msk [vmem:[%s302] ss:$8 sm:$0xf] %vm301, %v300
    %s304 = scalar_lea.vmem %s1, 132
    %305 = vst.msk [vmem:[%s304] ss:$8 sm:$0xf0] %vm301, %v300
    %s306 = scalar_lea.vmem [#allocation0], 24
    %v307 = vld [vmem:[%s306] sm:$0xff]
    %308 = vrot.lane.b32.xlu0 %v307, 112
    %v309 = vpop.permute.xlu0 %308
    %vm310 = vcmask 31744
    %s311 = scalar_lea.vmem %s1, 196
    %312 = vst.msk [vmem:[%s311] ss:$8 sm:$0xf] %vm310, %v309
    %s313 = scalar_lea.vmem %s1, 196
    %314 = vst.msk [vmem:[%s313] ss:$8 sm:$0xf0] %vm310, %v309
    %s315 = scalar_lea.vmem [#allocation0], 32
    %v316 = vld [vmem:[%s315] sm:$0xff]
    %317 = vrot.lane.b32.xlu0 %v316, 112
    %v318 = vpop.permute.xlu0 %317
    %vm319 = vcmask 31744
    %s320 = scalar_lea.vmem %s1, 260
    %321 = vst.msk [vmem:[%s320] ss:$8 sm:$0xf] %vm319, %v318
    %s322 = scalar_lea.vmem %s1, 260
    %323 = vst.msk [vmem:[%s322] ss:$8 sm:$0xf0] %vm319, %v318
    %s324 = scalar_lea.vmem [#allocation0], 40
    %v325 = vld [vmem:[%s324] sm:$0xff]
    %326 = vrot.lane.b32.xlu0 %v325, 112
    %v327 = vpop.permute.xlu0 %326
    %vm328 = vcmask 31744
    %s329 = scalar_lea.vmem %s1, 324
    %330 = vst.msk [vmem:[%s329] ss:$8 sm:$0xf] %vm328, %v327
    %s331 = scalar_lea.vmem %s1, 324
    %332 = vst.msk [vmem:[%s331] ss:$8 sm:$0xf0] %vm328, %v327
    %s333 = scalar_lea.vmem [#allocation0], 48
    %v334 = vld [vmem:[%s333] sm:$0xff]
    %335 = vrot.lane.b32.xlu0 %v334, 112
    %v336 = vpop.permute.xlu0 %335
    %vm337 = vcmask 31744
    %s338 = scalar_lea.vmem %s1, 388
    %339 = vst.msk [vmem:[%s338] ss:$8 sm:$0xf] %vm337, %v336
    %s340 = scalar_lea.vmem %s1, 388
    %341 = vst.msk [vmem:[%s340] ss:$8 sm:$0xf0] %vm337, %v336
    %s342 = scalar_lea.vmem [#allocation0], 56
    %v343 = vld [vmem:[%s342] sm:$0xff]
    %344 = vrot.lane.b32.xlu0 %v343, 112
    %v345 = vpop.permute.xlu0 %344
    %vm346 = vcmask 31744
    %s347 = scalar_lea.vmem %s1, 452
    %348 = vst.msk [vmem:[%s347] ss:$8 sm:$0xf] %vm346, %v345
    %s349 = scalar_lea.vmem %s1, 452
    %350 = vst.msk [vmem:[%s349] ss:$8 sm:$0xf0] %vm346, %v345
    %v351 = vld [vmem:[#allocation0] sm:$0xff]
    %352 = vrot.lane.b32.xlu0 %v351, 108
    %v353 = vpop.permute.xlu0 %352
    %vm354 = vcmask 31744
    %s355 = scalar_lea.vmem %s1, 5
    %356 = vst.msk [vmem:[%s355] ss:$8 sm:$0xf] %vm354, %v353
    %s357 = scalar_lea.vmem %s1, 5
    %358 = vst.msk [vmem:[%s357] ss:$8 sm:$0xf0] %vm354, %v353
    %s359 = scalar_lea.vmem [#allocation0], 8
    %v360 = vld [vmem:[%s359] sm:$0xff]
    %361 = vrot.lane.b32.xlu0 %v360, 108
    %v362 = vpop.permute.xlu0 %361
    %vm363 = vcmask 31744
    %s364 = scalar_lea.vmem %s1, 69
    %365 = vst.msk [vmem:[%s364] ss:$8 sm:$0xf] %vm363, %v362
    %s366 = scalar_lea.vmem %s1, 69
    %367 = vst.msk [vmem:[%s366] ss:$8 sm:$0xf0] %vm363, %v362
    %s368 = scalar_lea.vmem [#allocation0], 16
    %v369 = vld [vmem:[%s368] sm:$0xff]
    %370 = vrot.lane.b32.xlu0 %v369, 108
    %v371 = vpop.permute.xlu0 %370
    %vm372 = vcmask 31744
    %s373 = scalar_lea.vmem %s1, 133
    %374 = vst.msk [vmem:[%s373] ss:$8 sm:$0xf] %vm372, %v371
    %s375 = scalar_lea.vmem %s1, 133
    %376 = vst.msk [vmem:[%s375] ss:$8 sm:$0xf0] %vm372, %v371
    %s377 = scalar_lea.vmem [#allocation0], 24
    %v378 = vld [vmem:[%s377] sm:$0xff]
    %379 = vrot.lane.b32.xlu0 %v378, 108
    %v380 = vpop.permute.xlu0 %379
    %vm381 = vcmask 31744
    %s382 = scalar_lea.vmem %s1, 197
    %383 = vst.msk [vmem:[%s382] ss:$8 sm:$0xf] %vm381, %v380
    %s384 = scalar_lea.vmem %s1, 197
    %385 = vst.msk [vmem:[%s384] ss:$8 sm:$0xf0] %vm381, %v380
    %s386 = scalar_lea.vmem [#allocation0], 32
    %v387 = vld [vmem:[%s386] sm:$0xff]
    %388 = vrot.lane.b32.xlu0 %v387, 108
    %v389 = vpop.permute.xlu0 %388
    %vm390 = vcmask 31744
    %s391 = scalar_lea.vmem %s1, 261
    %392 = vst.msk [vmem:[%s391] ss:$8 sm:$0xf] %vm390, %v389
    %s393 = scalar_lea.vmem %s1, 261
    %394 = vst.msk [vmem:[%s393] ss:$8 sm:$0xf0] %vm390, %v389
    %s395 = scalar_lea.vmem [#allocation0], 40
    %v396 = vld [vmem:[%s395] sm:$0xff]
    %397 = vrot.lane.b32.xlu0 %v396, 108
    %v398 = vpop.permute.xlu0 %397
    %vm399 = vcmask 31744
    %s400 = scalar_lea.vmem %s1, 325
    %401 = vst.msk [vmem:[%s400] ss:$8 sm:$0xf] %vm399, %v398
    %s402 = scalar_lea.vmem %s1, 325
    %403 = vst.msk [vmem:[%s402] ss:$8 sm:$0xf0] %vm399, %v398
    %s404 = scalar_lea.vmem [#allocation0], 48
    %v405 = vld [vmem:[%s404] sm:$0xff]
    %406 = vrot.lane.b32.xlu0 %v405, 108
    %v407 = vpop.permute.xlu0 %406
    %vm408 = vcmask 31744
    %s409 = scalar_lea.vmem %s1, 389
    %410 = vst.msk [vmem:[%s409] ss:$8 sm:$0xf] %vm408, %v407
    %s411 = scalar_lea.vmem %s1, 389
    %412 = vst.msk [vmem:[%s411] ss:$8 sm:$0xf0] %vm408, %v407
    %s413 = scalar_lea.vmem [#allocation0], 56
    %v414 = vld [vmem:[%s413] sm:$0xff]
    %415 = vrot.lane.b32.xlu0 %v414, 108
    %v416 = vpop.permute.xlu0 %415
    %vm417 = vcmask 31744
    %s418 = scalar_lea.vmem %s1, 453
    %419 = vst.msk [vmem:[%s418] ss:$8 sm:$0xf] %vm417, %v416
    %s420 = scalar_lea.vmem %s1, 453
    %421 = vst.msk [vmem:[%s420] ss:$8 sm:$0xf0] %vm417, %v416
    %v422 = vld [vmem:[#allocation0] sm:$0xff]
    %423 = vrot.lane.b32.xlu0 %v422, 104
    %v424 = vpop.permute.xlu0 %423
    %vm425 = vcmask 31744
    %s426 = scalar_lea.vmem %s1, 6
    %427 = vst.msk [vmem:[%s426] ss:$8 sm:$0xf] %vm425, %v424
    %s428 = scalar_lea.vmem %s1, 6
    %429 = vst.msk [vmem:[%s428] ss:$8 sm:$0xf0] %vm425, %v424
    %s430 = scalar_lea.vmem [#allocation0], 8
    %v431 = vld [vmem:[%s430] sm:$0xff]
    %432 = vrot.lane.b32.xlu0 %v431, 104
    %v433 = vpop.permute.xlu0 %432
    %vm434 = vcmask 31744
    %s435 = scalar_lea.vmem %s1, 70
    %436 = vst.msk [vmem:[%s435] ss:$8 sm:$0xf] %vm434, %v433
    %s437 = scalar_lea.vmem %s1, 70
    %438 = vst.msk [vmem:[%s437] ss:$8 sm:$0xf0] %vm434, %v433
    %s439 = scalar_lea.vmem [#allocation0], 16
    %v440 = vld [vmem:[%s439] sm:$0xff]
    %441 = vrot.lane.b32.xlu0 %v440, 104
    %v442 = vpop.permute.xlu0 %441
    %vm443 = vcmask 31744
    %s444 = scalar_lea.vmem %s1, 134
    %445 = vst.msk [vmem:[%s444] ss:$8 sm:$0xf] %vm443, %v442
    %s446 = scalar_lea.vmem %s1, 134
    %447 = vst.msk [vmem:[%s446] ss:$8 sm:$0xf0] %vm443, %v442
    %s448 = scalar_lea.vmem [#allocation0], 24
    %v449 = vld [vmem:[%s448] sm:$0xff]
    %450 = vrot.lane.b32.xlu0 %v449, 104
    %v451 = vpop.permute.xlu0 %450
    %vm452 = vcmask 31744
    %s453 = scalar_lea.vmem %s1, 198
    %454 = vst.msk [vmem:[%s453] ss:$8 sm:$0xf] %vm452, %v451
    %s455 = scalar_lea.vmem %s1, 198
    %456 = vst.msk [vmem:[%s455] ss:$8 sm:$0xf0] %vm452, %v451
    %s457 = scalar_lea.vmem [#allocation0], 32
    %v458 = vld [vmem:[%s457] sm:$0xff]
    %459 = vrot.lane.b32.xlu0 %v458, 104
    %v460 = vpop.permute.xlu0 %459
    %vm461 = vcmask 31744
    %s462 = scalar_lea.vmem %s1, 262
    %463 = vst.msk [vmem:[%s462] ss:$8 sm:$0xf] %vm461, %v460
    %s464 = scalar_lea.vmem %s1, 262
    %465 = vst.msk [vmem:[%s464] ss:$8 sm:$0xf0] %vm461, %v460
    %s466 = scalar_lea.vmem [#allocation0], 40
    %v467 = vld [vmem:[%s466] sm:$0xff]
    %468 = vrot.lane.b32.xlu0 %v467, 104
    %v469 = vpop.permute.xlu0 %468
    %vm470 = vcmask 31744
    %s471 = scalar_lea.vmem %s1, 326
    %472 = vst.msk [vmem:[%s471] ss:$8 sm:$0xf] %vm470, %v469
    %s473 = scalar_lea.vmem %s1, 326
    %474 = vst.msk [vmem:[%s473] ss:$8 sm:$0xf0] %vm470, %v469
    %s475 = scalar_lea.vmem [#allocation0], 48
    %v476 = vld [vmem:[%s475] sm:$0xff]
    %477 = vrot.lane.b32.xlu0 %v476, 104
    %v478 = vpop.permute.xlu0 %477
    %vm479 = vcmask 31744
    %s480 = scalar_lea.vmem %s1, 390
    %481 = vst.msk [vmem:[%s480] ss:$8 sm:$0xf] %vm479, %v478
    %s482 = scalar_lea.vmem %s1, 390
    %483 = vst.msk [vmem:[%s482] ss:$8 sm:$0xf0] %vm479, %v478
    %s484 = scalar_lea.vmem [#allocation0], 56
    %v485 = vld [vmem:[%s484] sm:$0xff]
    %486 = vrot.lane.b32.xlu0 %v485, 104
    %v487 = vpop.permute.xlu0 %486
    %vm488 = vcmask 31744
    %s489 = scalar_lea.vmem %s1, 454
    %490 = vst.msk [vmem:[%s489] ss:$8 sm:$0xf] %vm488, %v487
    %s491 = scalar_lea.vmem %s1, 454
    %492 = vst.msk [vmem:[%s491] ss:$8 sm:$0xf0] %vm488, %v487
    %v493 = vld [vmem:[#allocation0] sm:$0xff]
    %494 = vrot.lane.b32.xlu0 %v493, 100
    %v495 = vpop.permute.xlu0 %494
    %vm496 = vcmask 31744
    %s497 = scalar_lea.vmem %s1, 7
    %498 = vst.msk [vmem:[%s497] ss:$8 sm:$0xf] %vm496, %v495
    %s499 = scalar_lea.vmem %s1, 7
    %500 = vst.msk [vmem:[%s499] ss:$8 sm:$0xf0] %vm496, %v495
    %s501 = scalar_lea.vmem [#allocation0], 8
    %v502 = vld [vmem:[%s501] sm:$0xff]
    %503 = vrot.lane.b32.xlu0 %v502, 100
    %v504 = vpop.permute.xlu0 %503
    %vm505 = vcmask 31744
    %s506 = scalar_lea.vmem %s1, 71
    %507 = vst.msk [vmem:[%s506] ss:$8 sm:$0xf] %vm505, %v504
    %s508 = scalar_lea.vmem %s1, 71
    %509 = vst.msk [vmem:[%s508] ss:$8 sm:$0xf0] %vm505, %v504
    %s510 = scalar_lea.vmem [#allocation0], 16
    %v511 = vld [vmem:[%s510] sm:$0xff]
    %512 = vrot.lane.b32.xlu0 %v511, 100
    %v513 = vpop.permute.xlu0 %512
    %vm514 = vcmask 31744
    %s515 = scalar_lea.vmem %s1, 135
    %516 = vst.msk [vmem:[%s515] ss:$8 sm:$0xf] %vm514, %v513
    %s517 = scalar_lea.vmem %s1, 135
    %518 = vst.msk [vmem:[%s517] ss:$8 sm:$0xf0] %vm514, %v513
    %s519 = scalar_lea.vmem [#allocation0], 24
    %v520 = vld [vmem:[%s519] sm:$0xff]
    %521 = vrot.lane.b32.xlu0 %v520, 100
    %v522 = vpop.permute.xlu0 %521
    %vm523 = vcmask 31744
    %s524 = scalar_lea.vmem %s1, 199
    %525 = vst.msk [vmem:[%s524] ss:$8 sm:$0xf] %vm523, %v522
    %s526 = scalar_lea.vmem %s1, 199
    %527 = vst.msk [vmem:[%s526] ss:$8 sm:$0xf0] %vm523, %v522
    %s528 = scalar_lea.vmem [#allocation0], 32
    %v529 = vld [vmem:[%s528] sm:$0xff]
    %530 = vrot.lane.b32.xlu0 %v529, 100
    %v531 = vpop.permute.xlu0 %530
    %vm532 = vcmask 31744
    %s533 = scalar_lea.vmem %s1, 263
    %534 = vst.msk [vmem:[%s533] ss:$8 sm:$0xf] %vm532, %v531
    %s535 = scalar_lea.vmem %s1, 263
    %536 = vst.msk [vmem:[%s535] ss:$8 sm:$0xf0] %vm532, %v531
    %s537 = scalar_lea.vmem [#allocation0], 40
    %v538 = vld [vmem:[%s537] sm:$0xff]
    %539 = vrot.lane.b32.xlu0 %v538, 100
    %v540 = vpop.permute.xlu0 %539
    %vm541 = vcmask 31744
    %s542 = scalar_lea.vmem %s1, 327
    %543 = vst.msk [vmem:[%s542] ss:$8 sm:$0xf] %vm541, %v540
    %s544 = scalar_lea.vmem %s1, 327
    %545 = vst.msk [vmem:[%s544] ss:$8 sm:$0xf0] %vm541, %v540
    %s546 = scalar_lea.vmem [#allocation0], 48
    %v547 = vld [vmem:[%s546] sm:$0xff]
    %548 = vrot.lane.b32.xlu0 %v547, 100
    %v549 = vpop.permute.xlu0 %548
    %vm550 = vcmask 31744
    %s551 = scalar_lea.vmem %s1, 391
    %552 = vst.msk [vmem:[%s551] ss:$8 sm:$0xf] %vm550, %v549
    %s553 = scalar_lea.vmem %s1, 391
    %554 = vst.msk [vmem:[%s553] ss:$8 sm:$0xf0] %vm550, %v549
    %s555 = scalar_lea.vmem [#allocation0], 56
    %v556 = vld [vmem:[%s555] sm:$0xff]
    %557 = vrot.lane.b32.xlu0 %v556, 100
    %v558 = vpop.permute.xlu0 %557
    %vm559 = vcmask 31744
    %s560 = scalar_lea.vmem %s1, 455
    %561 = vst.msk [vmem:[%s560] ss:$8 sm:$0xf] %vm559, %v558
    %s562 = scalar_lea.vmem %s1, 455
    %563 = vst.msk [vmem:[%s562] ss:$8 sm:$0xf0] %vm559, %v558
    %564 = vsyncpa [#allocation1], 1

// kernel: keypoint_forward.1
$region0: #{keypoint_forward.1}
  #allocation0 [shape = 'u32[]', space=smem, size = 0x4, offset = 0x4, fixed_abs, tag = 'smem constant byte address 0x4 - core index']
  #allocation1 [shape = 'u32[72,128]{1,0:T(1,128)}', space=vmem, size = 0x9000, scoped, tag = 'internal scratch']
  %s0 = inlined_call_operand.vmem [shape: f32[32,64], index: 0, kind: input, shape index: {}]
  %s1 = inlined_call_operand.vmem [shape: f32[512,32], index: 1, kind: input, shape index: {}]
  %s2 = inlined_call_operand.vmem [shape: f32[512,1], index: 2, kind: input, shape index: {}]
  %s3 = inlined_call_operand.vmem [shape: f32[22,512], index: 3, kind: input, shape index: {}]
  %s4 = inlined_call_operand.vmem [shape: f32[22,1], index: 4, kind: input, shape index: {}]
  %s5 = inlined_call_operand.vmem [shape: f32[64,1024], index: 5, kind: input, shape index: {}]
  %s6 = inlined_call_operand.vmem [shape: s32[22,1], index: 6, kind: output, shape index: {}]
  %s7 = sld [smem:[#allocation0]]
  $region34: #{keypoint_forward.1} parent=0
    _
  %s9 = ssub.s32 1, %s7
  %s10 = scalar_select 0, %s9, %s7
  // Predicated region
  $region2: #{keypoint_forward.1} parent=0 // pred_check
    _
  $region3: #{keypoint_forward.1} parent=0 // pred_check_branch
    %12 = sbr.rel (0) target = $region5
  $region4: #{keypoint_forward.1} parent=0 // pred_region
    _
  $region5: #{keypoint_forward.1} parent=0 // pred_fallthru
    _
  // Predicated region
  $region6: #{keypoint_forward.1} parent=0 // pred_check
    _
  $region7: #{keypoint_forward.1} parent=0 // pred_check_branch
    %14 = sbr.rel (0) target = $region9
  $region8: #{keypoint_forward.1} parent=0 // pred_region
    _
  $region9: #{keypoint_forward.1} parent=0 // pred_fallthru
    _
  // Predicated region
  $region10: #{keypoint_forward.1} parent=0 // pred_check
    _
  $region11: #{keypoint_forward.1} parent=0 // pred_check_branch
    %16 = sbr.rel (0) target = $region13
  $region12: #{keypoint_forward.1} parent=0 // pred_region
    _
  $region13: #{keypoint_forward.1} parent=0 // pred_fallthru
    _
  // Predicated region
  $region14: #{keypoint_forward.1} parent=0 // pred_check
    _
  $region15: #{keypoint_forward.1} parent=0 // pred_check_branch
    %18 = sbr.rel (0) target = $region17
  $region16: #{keypoint_forward.1} parent=0 // pred_region
    _
  $region17: #{keypoint_forward.1} parent=0 // pred_fallthru
    _
  // Predicated region
  $region18: #{keypoint_forward.1} parent=0 // pred_check
    _
  $region19: #{keypoint_forward.1} parent=0 // pred_check_branch
    %20 = sbr.rel (0) target = $region21
  $region20: #{keypoint_forward.1} parent=0 // pred_region
    _
  $region21: #{keypoint_forward.1} parent=0 // pred_fallthru
    _
  // Predicated region
  $region22: #{keypoint_forward.1} parent=0 // pred_check
    _
  $region23: #{keypoint_forward.1} parent=0 // pred_check_branch
    %22 = sbr.rel (0) target = $region25
  $region24: #{keypoint_forward.1} parent=0 // pred_region
    _
  $region25: #{keypoint_forward.1} parent=0 // pred_fallthru
    _
  %v23 = vld [vmem:[%s0] sm:$0xff]
  %v24 = vld [vmem:[%s0 + $0x8] sm:$0xff]
  %v25 = vld [vmem:[%s0 + $0x10] sm:$0xff]
  %v26 = vld [vmem:[%s0 + $0x18] sm:$0xff]
  %v27 = vsub.f32 %v23, 0.5
  %v28 = vsub.f32 %v24, 0.5
  %v29 = vsub.f32 %v25, 0.5
  %v30 = vsub.f32 %v26, 0.5
  %v31 = vld [vmem:[%s1] sm:$0xff]
  %v32 = vld [vmem:[%s1 + $0x8] sm:$0xff]
  %v33 = vld [vmem:[%s1 + $0x10] sm:$0xff]
  %v34 = vld [vmem:[%s1 + $0x18] sm:$0xff]
  %v35 = vld [vmem:[%s1 + $0x20] sm:$0xff]
  %v36 = vld [vmem:[%s1 + $0x28] sm:$0xff]
  %v37 = vld [vmem:[%s1 + $0x30] sm:$0xff]
  %v38 = vld [vmem:[%s1 + $0x38] sm:$0xff]
  %v39 = vld [vmem:[%s1 + $0x40] sm:$0xff]
  %v40 = vld [vmem:[%s1 + $0x48] sm:$0xff]
  %v41 = vld [vmem:[%s1 + $0x50] sm:$0xff]
  %v42 = vld [vmem:[%s1 + $0x58] sm:$0xff]
  %v43 = vld [vmem:[%s1 + $0x60] sm:$0xff]
  %v44 = vld [vmem:[%s1 + $0x68] sm:$0xff]
  %v45 = vld [vmem:[%s1 + $0x70] sm:$0xff]
  %v46 = vld [vmem:[%s1 + $0x78] sm:$0xff]
  %v47 = vld [vmem:[%s1 + $0x80] sm:$0xff]
  %v48 = vld [vmem:[%s1 + $0x88] sm:$0xff]
  %v49 = vld [vmem:[%s1 + $0x90] sm:$0xff]
  %v50 = vld [vmem:[%s1 + $0x98] sm:$0xff]
  %v51 = vld [vmem:[%s1 + $0xa0] sm:$0xff]
  %v52 = vld [vmem:[%s1 + $0xa8] sm:$0xff]
  %v53 = vld [vmem:[%s1 + $0xb0] sm:$0xff]
  %v54 = vld [vmem:[%s1 + $0xb8] sm:$0xff]
  %v55 = vld [vmem:[%s1 + $0xc0] sm:$0xff]
  %v56 = vld [vmem:[%s1 + $0xc8] sm:$0xff]
  %v57 = vld [vmem:[%s1 + $0xd0] sm:$0xff]
  %v58 = vld [vmem:[%s1 + $0xd8] sm:$0xff]
  %v59 = vld [vmem:[%s1 + $0xe0] sm:$0xff]
  %v60 = vld [vmem:[%s1 + $0xe8] sm:$0xff]
  %v61 = vld [vmem:[%s1 + $0xf0] sm:$0xff]
  %v62 = vld [vmem:[%s1 + $0xf8] sm:$0xff]
  %v63 = vld [vmem:[%s1 + $0x100] sm:$0xff]
  %v64 = vld [vmem:[%s1 + $0x108] sm:$0xff]
  %v65 = vld [vmem:[%s1 + $0x110] sm:$0xff]
  %v66 = vld [vmem:[%s1 + $0x118] sm:$0xff]
  %v67 = vld [vmem:[%s1 + $0x120] sm:$0xff]
  %v68 = vld [vmem:[%s1 + $0x128] sm:$0xff]
  %v69 = vld [vmem:[%s1 + $0x130] sm:$0xff]
  %v70 = vld [vmem:[%s1 + $0x138] sm:$0xff]
  %v71 = vld [vmem:[%s1 + $0x140] sm:$0xff]
  %v72 = vld [vmem:[%s1 + $0x148] sm:$0xff]
  %v73 = vld [vmem:[%s1 + $0x150] sm:$0xff]
  %v74 = vld [vmem:[%s1 + $0x158] sm:$0xff]
  %v75 = vld [vmem:[%s1 + $0x160] sm:$0xff]
  %v76 = vld [vmem:[%s1 + $0x168] sm:$0xff]
  %v77 = vld [vmem:[%s1 + $0x170] sm:$0xff]
  %v78 = vld [vmem:[%s1 + $0x178] sm:$0xff]
  %v79 = vld [vmem:[%s1 + $0x180] sm:$0xff]
  %v80 = vld [vmem:[%s1 + $0x188] sm:$0xff]
  %v81 = vld [vmem:[%s1 + $0x190] sm:$0xff]
  %v82 = vld [vmem:[%s1 + $0x198] sm:$0xff]
  %v83 = vld [vmem:[%s1 + $0x1a0] sm:$0xff]
  %v84 = vld [vmem:[%s1 + $0x1a8] sm:$0xff]
  %v85 = vld [vmem:[%s1 + $0x1b0] sm:$0xff]
  %v86 = vld [vmem:[%s1 + $0x1b8] sm:$0xff]
  %v87 = vld [vmem:[%s1 + $0x1c0] sm:$0xff]
  %v88 = vld [vmem:[%s1 + $0x1c8] sm:$0xff]
  %v89 = vld [vmem:[%s1 + $0x1d0] sm:$0xff]
  %v90 = vld [vmem:[%s1 + $0x1d8] sm:$0xff]
  %v91 = vld [vmem:[%s1 + $0x1e0] sm:$0xff]
  %v92 = vld [vmem:[%s1 + $0x1e8] sm:$0xff]
  %v93 = vld [vmem:[%s1 + $0x1f0] sm:$0xff]
  %v94 = vld [vmem:[%s1 + $0x1f8] sm:$0xff]
  %v95 = vld [vmem:[%s2] sm:$0xff]
  %v96 = vld [vmem:[%s2 + $0x8] sm:$0xff]
  %v97 = vld [vmem:[%s2 + $0x10] sm:$0xff]
  %v98 = vld [vmem:[%s2 + $0x18] sm:$0xff]
  %v99 = vld [vmem:[%s2 + $0x20] sm:$0xff]
  %v100 = vld [vmem:[%s2 + $0x28] sm:$0xff]
  %v101 = vld [vmem:[%s2 + $0x30] sm:$0xff]
  %v102 = vld [vmem:[%s2 + $0x38] sm:$0xff]
  %v103 = vld [vmem:[%s2 + $0x40] sm:$0xff]
  %v104 = vld [vmem:[%s2 + $0x48] sm:$0xff]
  %v105 = vld [vmem:[%s2 + $0x50] sm:$0xff]
  %v106 = vld [vmem:[%s2 + $0x58] sm:$0xff]
  %v107 = vld [vmem:[%s2 + $0x60] sm:$0xff]
  %v108 = vld [vmem:[%s2 + $0x68] sm:$0xff]
  %v109 = vld [vmem:[%s2 + $0x70] sm:$0xff]
  %v110 = vld [vmem:[%s2 + $0x78] sm:$0xff]
  %v111 = vld [vmem:[%s2 + $0x80] sm:$0xff]
  %v112 = vld [vmem:[%s2 + $0x88] sm:$0xff]
  %v113 = vld [vmem:[%s2 + $0x90] sm:$0xff]
  %v114 = vld [vmem:[%s2 + $0x98] sm:$0xff]
  %v115 = vld [vmem:[%s2 + $0xa0] sm:$0xff]
  %v116 = vld [vmem:[%s2 + $0xa8] sm:$0xff]
  %v117 = vld [vmem:[%s2 + $0xb0] sm:$0xff]
  %v118 = vld [vmem:[%s2 + $0xb8] sm:$0xff]
  %v119 = vld [vmem:[%s2 + $0xc0] sm:$0xff]
  %v120 = vld [vmem:[%s2 + $0xc8] sm:$0xff]
  %v121 = vld [vmem:[%s2 + $0xd0] sm:$0xff]
  %v122 = vld [vmem:[%s2 + $0xd8] sm:$0xff]
  %v123 = vld [vmem:[%s2 + $0xe0] sm:$0xff]
  %v124 = vld [vmem:[%s2 + $0xe8] sm:$0xff]
  %v125 = vld [vmem:[%s2 + $0xf0] sm:$0xff]
  %v126 = vld [vmem:[%s2 + $0xf8] sm:$0xff]
  %v127 = vld [vmem:[%s2 + $0x100] sm:$0xff]
  %v128 = vld [vmem:[%s2 + $0x108] sm:$0xff]
  %v129 = vld [vmem:[%s2 + $0x110] sm:$0xff]
  %v130 = vld [vmem:[%s2 + $0x118] sm:$0xff]
  %v131 = vld [vmem:[%s2 + $0x120] sm:$0xff]
  %v132 = vld [vmem:[%s2 + $0x128] sm:$0xff]
  %v133 = vld [vmem:[%s2 + $0x130] sm:$0xff]
  %v134 = vld [vmem:[%s2 + $0x138] sm:$0xff]
  %v135 = vld [vmem:[%s2 + $0x140] sm:$0xff]
  %v136 = vld [vmem:[%s2 + $0x148] sm:$0xff]
  %v137 = vld [vmem:[%s2 + $0x150] sm:$0xff]
  %v138 = vld [vmem:[%s2 + $0x158] sm:$0xff]
  %v139 = vld [vmem:[%s2 + $0x160] sm:$0xff]
  %v140 = vld [vmem:[%s2 + $0x168] sm:$0xff]
  %v141 = vld [vmem:[%s2 + $0x170] sm:$0xff]
  %v142 = vld [vmem:[%s2 + $0x178] sm:$0xff]
  %v143 = vld [vmem:[%s2 + $0x180] sm:$0xff]
  %v144 = vld [vmem:[%s2 + $0x188] sm:$0xff]
  %v145 = vld [vmem:[%s2 + $0x190] sm:$0xff]
  %v146 = vld [vmem:[%s2 + $0x198] sm:$0xff]
  %v147 = vld [vmem:[%s2 + $0x1a0] sm:$0xff]
  %v148 = vld [vmem:[%s2 + $0x1a8] sm:$0xff]
  %v149 = vld [vmem:[%s2 + $0x1b0] sm:$0xff]
  %v150 = vld [vmem:[%s2 + $0x1b8] sm:$0xff]
  %v151 = vld [vmem:[%s2 + $0x1c0] sm:$0xff]
  %v152 = vld [vmem:[%s2 + $0x1c8] sm:$0xff]
  %v153 = vld [vmem:[%s2 + $0x1d0] sm:$0xff]
  %v154 = vld [vmem:[%s2 + $0x1d8] sm:$0xff]
  %v155 = vld [vmem:[%s2 + $0x1e0] sm:$0xff]
  %v156 = vld [vmem:[%s2 + $0x1e8] sm:$0xff]
  %v157 = vld [vmem:[%s2 + $0x1f0] sm:$0xff]
  %v158 = vld [vmem:[%s2 + $0x1f8] sm:$0xff]
  %160 = vset.pattern.permute.xlu0 0
  %161 = vperm.xlu0 %160, %v95
  %v162 = vpop.permute.xlu0 %161
  %165 = vset.pattern.permute.xlu0 0
  %166 = vperm.xlu0 %165, %v96
  %v167 = vpop.permute.xlu0 %166
  %170 = vset.pattern.permute.xlu0 0
  %171 = vperm.xlu0 %170, %v97
  %v172 = vpop.permute.xlu0 %171
  %175 = vset.pattern.permute.xlu0 0
  %176 = vperm.xlu0 %175, %v98
  %v177 = vpop.permute.xlu0 %176
  %180 = vset.pattern.permute.xlu0 0
  %181 = vperm.xlu0 %180, %v99
  %v182 = vpop.permute.xlu0 %181
  %185 = vset.pattern.permute.xlu0 0
  %186 = vperm.xlu0 %185, %v100
  %v187 = vpop.permute.xlu0 %186
  %190 = vset.pattern.permute.xlu0 0
  %191 = vperm.xlu0 %190, %v101
  %v192 = vpop.permute.xlu0 %191
  %195 = vset.pattern.permute.xlu0 0
  %196 = vperm.xlu0 %195, %v102
  %v197 = vpop.permute.xlu0 %196
  %200 = vset.pattern.permute.xlu0 0
  %201 = vperm.xlu0 %200, %v103
  %v202 = vpop.permute.xlu0 %201
  %205 = vset.pattern.permute.xlu0 0
  %206 = vperm.xlu0 %205, %v104
  %v207 = vpop.permute.xlu0 %206
  %210 = vset.pattern.permute.xlu0 0
  %211 = vperm.xlu0 %210, %v105
  %v212 = vpop.permute.xlu0 %211
  %215 = vset.pattern.permute.xlu0 0
  %216 = vperm.xlu0 %215, %v106
  %v217 = vpop.permute.xlu0 %216
  %220 = vset.pattern.permute.xlu0 0
  %221 = vperm.xlu0 %220, %v107
  %v222 = vpop.permute.xlu0 %221
  %225 = vset.pattern.permute.xlu0 0
  %226 = vperm.xlu0 %225, %v108
  %v227 = vpop.permute.xlu0 %226
  %230 = vset.pattern.permute.xlu0 0
  %231 = vperm.xlu0 %230, %v109
  %v232 = vpop.permute.xlu0 %231
  %235 = vset.pattern.permute.xlu0 0
  %236 = vperm.xlu0 %235, %v110
  %v237 = vpop.permute.xlu0 %236
  %240 = vset.pattern.permute.xlu0 0
  %241 = vperm.xlu0 %240, %v111
  %v242 = vpop.permute.xlu0 %241
  %245 = vset.pattern.permute.xlu0 0
  %246 = vperm.xlu0 %245, %v112
  %v247 = vpop.permute.xlu0 %246
  %250 = vset.pattern.permute.xlu0 0
  %251 = vperm.xlu0 %250, %v113
  %v252 = vpop.permute.xlu0 %251
  %255 = vset.pattern.permute.xlu0 0
  %256 = vperm.xlu0 %255, %v114
  %v257 = vpop.permute.xlu0 %256
  %260 = vset.pattern.permute.xlu0 0
  %261 = vperm.xlu0 %260, %v115
  %v262 = vpop.permute.xlu0 %261
  %265 = vset.pattern.permute.xlu0 0
  %266 = vperm.xlu0 %265, %v116
  %v267 = vpop.permute.xlu0 %266
  %270 = vset.pattern.permute.xlu0 0
  %271 = vperm.xlu0 %270, %v117
  %v272 = vpop.permute.xlu0 %271
  %275 = vset.pattern.permute.xlu0 0
  %276 = vperm.xlu0 %275, %v118
  %v277 = vpop.permute.xlu0 %276
  %280 = vset.pattern.permute.xlu0 0
  %281 = vperm.xlu0 %280, %v119
  %v282 = vpop.permute.xlu0 %281
  %285 = vset.pattern.permute.xlu0 0
  %286 = vperm.xlu0 %285, %v120
  %v287 = vpop.permute.xlu0 %286
  %290 = vset.pattern.permute.xlu0 0
  %291 = vperm.xlu0 %290, %v121
  %v292 = vpop.permute.xlu0 %291
  %295 = vset.pattern.permute.xlu0 0
  %296 = vperm.xlu0 %295, %v122
  %v297 = vpop.permute.xlu0 %296
  %300 = vset.pattern.permute.xlu0 0
  %301 = vperm.xlu0 %300, %v123
  %v302 = vpop.permute.xlu0 %301
  %305 = vset.pattern.permute.xlu0 0
  %306 = vperm.xlu0 %305, %v124
  %v307 = vpop.permute.xlu0 %306
  %310 = vset.pattern.permute.xlu0 0
  %311 = vperm.xlu0 %310, %v125
  %v312 = vpop.permute.xlu0 %311
  %315 = vset.pattern.permute.xlu0 0
  %316 = vperm.xlu0 %315, %v126
  %v317 = vpop.permute.xlu0 %316
  %320 = vset.pattern.permute.xlu0 0
  %321 = vperm.xlu0 %320, %v127
  %v322 = vpop.permute.xlu0 %321
  %325 = vset.pattern.permute.xlu0 0
  %326 = vperm.xlu0 %325, %v128
  %v327 = vpop.permute.xlu0 %326
  %330 = vset.pattern.permute.xlu0 0
  %331 = vperm.xlu0 %330, %v129
  %v332 = vpop.permute.xlu0 %331
  %335 = vset.pattern.permute.xlu0 0
  %336 = vperm.xlu0 %335, %v130
  %v337 = vpop.permute.xlu0 %336
  %340 = vset.pattern.permute.xlu0 0
  %341 = vperm.xlu0 %340, %v131
  %v342 = vpop.permute.xlu0 %341
  %345 = vset.pattern.permute.xlu0 0
  %346 = vperm.xlu0 %345, %v132
  %v347 = vpop.permute.xlu0 %346
  %350 = vset.pattern.permute.xlu0 0
  %351 = vperm.xlu0 %350, %v133
  %v352 = vpop.permute.xlu0 %351
  %355 = vset.pattern.permute.xlu0 0
  %356 = vperm.xlu0 %355, %v134
  %v357 = vpop.permute.xlu0 %356
  %360 = vset.pattern.permute.xlu0 0
  %361 = vperm.xlu0 %360, %v135
  %v362 = vpop.permute.xlu0 %361
  %365 = vset.pattern.permute.xlu0 0
  %366 = vperm.xlu0 %365, %v136
  %v367 = vpop.permute.xlu0 %366
  %370 = vset.pattern.permute.xlu0 0
  %371 = vperm.xlu0 %370, %v137
  %v372 = vpop.permute.xlu0 %371
  %375 = vset.pattern.permute.xlu0 0
  %376 = vperm.xlu0 %375, %v138
  %v377 = vpop.permute.xlu0 %376
  %380 = vset.pattern.permute.xlu0 0
  %381 = vperm.xlu0 %380, %v139
  %v382 = vpop.permute.xlu0 %381
  %385 = vset.pattern.permute.xlu0 0
  %386 = vperm.xlu0 %385, %v140
  %v387 = vpop.permute.xlu0 %386
  %390 = vset.pattern.permute.xlu0 0
  %391 = vperm.xlu0 %390, %v141
  %v392 = vpop.permute.xlu0 %391
  %395 = vset.pattern.permute.xlu0 0
  %396 = vperm.xlu0 %395, %v142
  %v397 = vpop.permute.xlu0 %396
  %400 = vset.pattern.permute.xlu0 0
  %401 = vperm.xlu0 %400, %v143
  %v402 = vpop.permute.xlu0 %401
  %405 = vset.pattern.permute.xlu0 0
  %406 = vperm.xlu0 %405, %v144
  %v407 = vpop.permute.xlu0 %406
  %410 = vset.pattern.permute.xlu0 0
  %411 = vperm.xlu0 %410, %v145
  %v412 = vpop.permute.xlu0 %411
  %415 = vset.pattern.permute.xlu0 0
  %416 = vperm.xlu0 %415, %v146
  %v417 = vpop.permute.xlu0 %416
  %420 = vset.pattern.permute.xlu0 0
  %421 = vperm.xlu0 %420, %v147
  %v422 = vpop.permute.xlu0 %421
  %425 = vset.pattern.permute.xlu0 0
  %426 = vperm.xlu0 %425, %v148
  %v427 = vpop.permute.xlu0 %426
  %430 = vset.pattern.permute.xlu0 0
  %431 = vperm.xlu0 %430, %v149
  %v432 = vpop.permute.xlu0 %431
  %435 = vset.pattern.permute.xlu0 0
  %436 = vperm.xlu0 %435, %v150
  %v437 = vpop.permute.xlu0 %436
  %440 = vset.pattern.permute.xlu0 0
  %441 = vperm.xlu0 %440, %v151
  %v442 = vpop.permute.xlu0 %441
  %445 = vset.pattern.permute.xlu0 0
  %446 = vperm.xlu0 %445, %v152
  %v447 = vpop.permute.xlu0 %446
  %450 = vset.pattern.permute.xlu0 0
  %451 = vperm.xlu0 %450, %v153
  %v452 = vpop.permute.xlu0 %451
  %455 = vset.pattern.permute.xlu0 0
  %456 = vperm.xlu0 %455, %v154
  %v457 = vpop.permute.xlu0 %456
  %460 = vset.pattern.permute.xlu0 0
  %461 = vperm.xlu0 %460, %v155
  %v462 = vpop.permute.xlu0 %461
  %465 = vset.pattern.permute.xlu0 0
  %466 = vperm.xlu0 %465, %v156
  %v467 = vpop.permute.xlu0 %466
  %470 = vset.pattern.permute.xlu0 0
  %471 = vperm.xlu0 %470, %v157
  %v472 = vpop.permute.xlu0 %471
  %475 = vset.pattern.permute.xlu0 0
  %476 = vperm.xlu0 %475, %v158
  %v477 = vpop.permute.xlu0 %476
  %vm479 = vcmask 261120
  %v481 = vsel %vm479, %v31, 0
  %v484 = vsel %vm479, %v32, 0
  %v487 = vsel %vm479, %v33, 0
  %v490 = vsel %vm479, %v34, 0
  %v493 = vsel %vm479, %v35, 0
  %v496 = vsel %vm479, %v36, 0
  %v499 = vsel %vm479, %v37, 0
  %v502 = vsel %vm479, %v38, 0
  %v505 = vsel %vm479, %v39, 0
  %v508 = vsel %vm479, %v40, 0
  %v511 = vsel %vm479, %v41, 0
  %v514 = vsel %vm479, %v42, 0
  %v517 = vsel %vm479, %v43, 0
  %v520 = vsel %vm479, %v44, 0
  %v523 = vsel %vm479, %v45, 0
  %v526 = vsel %vm479, %v46, 0
  %v529 = vsel %vm479, %v47, 0
  %v532 = vsel %vm479, %v48, 0
  %v535 = vsel %vm479, %v49, 0
  %v538 = vsel %vm479, %v50, 0
  %v541 = vsel %vm479, %v51, 0
  %v544 = vsel %vm479, %v52, 0
  %v547 = vsel %vm479, %v53, 0
  %v550 = vsel %vm479, %v54, 0
  %v553 = vsel %vm479, %v55, 0
  %v556 = vsel %vm479, %v56, 0
  %v559 = vsel %vm479, %v57, 0
  %v562 = vsel %vm479, %v58, 0
  %v565 = vsel %vm479, %v59, 0
  %v568 = vsel %vm479, %v60, 0
  %v571 = vsel %vm479, %v61, 0
  %v574 = vsel %vm479, %v62, 0
  %v577 = vsel %vm479, %v63, 0
  %v580 = vsel %vm479, %v64, 0
  %v583 = vsel %vm479, %v65, 0
  %v586 = vsel %vm479, %v66, 0
  %v589 = vsel %vm479, %v67, 0
  %v592 = vsel %vm479, %v68, 0
  %v595 = vsel %vm479, %v69, 0
  %v598 = vsel %vm479, %v70, 0
  %v601 = vsel %vm479, %v71, 0
  %v604 = vsel %vm479, %v72, 0
  %v607 = vsel %vm479, %v73, 0
  %v610 = vsel %vm479, %v74, 0
  %v613 = vsel %vm479, %v75, 0
  %v616 = vsel %vm479, %v76, 0
  %v619 = vsel %vm479, %v77, 0
  %v622 = vsel %vm479, %v78, 0
  %v625 = vsel %vm479, %v79, 0
  %v628 = vsel %vm479, %v80, 0
  %v631 = vsel %vm479, %v81, 0
  %v634 = vsel %vm479, %v82, 0
  %v637 = vsel %vm479, %v83, 0
  %v640 = vsel %vm479, %v84, 0
  %v643 = vsel %vm479, %v85, 0
  %v646 = vsel %vm479, %v86, 0
  %v649 = vsel %vm479, %v87, 0
  %v652 = vsel %vm479, %v88, 0
  %v655 = vsel %vm479, %v89, 0
  %v658 = vsel %vm479, %v90, 0
  %v661 = vsel %vm479, %v91, 0
  %v664 = vsel %vm479, %v92, 0
  %v667 = vsel %vm479, %v93, 0
  %v670 = vsel %vm479, %v94, 0
  %672 = vmatpush.msra.mxu0 0.0
  %673 = vmatpush.msra.mxu0 0.0
  %674 = vmatpush.msra.mxu0 0.0
  %675 = vmatpush.msra.mxu0 0.0
  %676 = vmatpush.msra.mxu0 0.0
  %677 = vmatpush.msra.mxu0 0.0
  %678 = vmatpush.msra.mxu0 0.0
  %679 = vmatpush.msra.mxu0 0.0
  %680 = vmatpush.msra.mxu0 0.0
  %681 = vmatpush.msra.mxu0 0.0
  %682 = vmatpush.msra.mxu0 0.0
  %683 = vmatpush.msra.mxu0 0.0
  %684 = vmatpush.msra.mxu0 %v30
  %685 = vmatpush.msra.mxu0 %v29
  %686 = vmatpush.msra.mxu0 %v28
  %687 = vmatpush.msra.mxu0 %v27
  %688 = vmatmul.f32.gmra.mxu0 %v481
  %v689 = vpop.f32.mrf.mxu0
  %v690 = vadd.f32 %v162, %v689
  %691 = vmatmul.f32.gmra.mxu0 %v484
  %v692 = vpop.f32.mrf.mxu0
  %v693 = vadd.f32 %v167, %v692
  %694 = vmatmul.f32.gmra.mxu0 %v487
  %v695 = vpop.f32.mrf.mxu0
  %v696 = vadd.f32 %v172, %v695
  %697 = vmatmul.f32.gmra.mxu0 %v490
  %v698 = vpop.f32.mrf.mxu0
  %v699 = vadd.f32 %v177, %v698
  %700 = vmatmul.f32.gmra.mxu0 %v493
  %v701 = vpop.f32.mrf.mxu0
  %v702 = vadd.f32 %v182, %v701
  %703 = vmatmul.f32.gmra.mxu0 %v496
  %v704 = vpop.f32.mrf.mxu0
  %v705 = vadd.f32 %v187, %v704
  %706 = vmatmul.f32.gmra.mxu0 %v499
  %v707 = vpop.f32.mrf.mxu0
  %v708 = vadd.f32 %v192, %v707
  %709 = vmatmul.f32.gmra.mxu0 %v502
  %v710 = vpop.f32.mrf.mxu0
  %v711 = vadd.f32 %v197, %v710
  %712 = vmatmul.f32.gmra.mxu0 %v505
  %v713 = vpop.f32.mrf.mxu0
  %v714 = vadd.f32 %v202, %v713
  %715 = vmatmul.f32.gmra.mxu0 %v508
  %v716 = vpop.f32.mrf.mxu0
  %v717 = vadd.f32 %v207, %v716
  %718 = vmatmul.f32.gmra.mxu0 %v511
  %v719 = vpop.f32.mrf.mxu0
  %v720 = vadd.f32 %v212, %v719
  %721 = vmatmul.f32.gmra.mxu0 %v514
  %v722 = vpop.f32.mrf.mxu0
  %v723 = vadd.f32 %v217, %v722
  %724 = vmatmul.f32.gmra.mxu0 %v517
  %v725 = vpop.f32.mrf.mxu0
  %v726 = vadd.f32 %v222, %v725
  %727 = vmatmul.f32.gmra.mxu0 %v520
  %v728 = vpop.f32.mrf.mxu0
  %v729 = vadd.f32 %v227, %v728
  %730 = vmatmul.f32.gmra.mxu0 %v523
  %v731 = vpop.f32.mrf.mxu0
  %v732 = vadd.f32 %v232, %v731
  %733 = vmatmul.f32.gmra.mxu0 %v526
  %v734 = vpop.f32.mrf.mxu0
  %v735 = vadd.f32 %v237, %v734
  %736 = vmatmul.f32.gmra.mxu0 %v529
  %v737 = vpop.f32.mrf.mxu0
  %v738 = vadd.f32 %v242, %v737
  %739 = vmatmul.f32.gmra.mxu0 %v532
  %v740 = vpop.f32.mrf.mxu0
  %v741 = vadd.f32 %v247, %v740
  %742 = vmatmul.f32.gmra.mxu0 %v535
  %v743 = vpop.f32.mrf.mxu0
  %v744 = vadd.f32 %v252, %v743
  %745 = vmatmul.f32.gmra.mxu0 %v538
  %v746 = vpop.f32.mrf.mxu0
  %v747 = vadd.f32 %v257, %v746
  %748 = vmatmul.f32.gmra.mxu0 %v541
  %v749 = vpop.f32.mrf.mxu0
  %v750 = vadd.f32 %v262, %v749
  %751 = vmatmul.f32.gmra.mxu0 %v544
  %v752 = vpop.f32.mrf.mxu0
  %v753 = vadd.f32 %v267, %v752
  %754 = vmatmul.f32.gmra.mxu0 %v547
  %v755 = vpop.f32.mrf.mxu0
  %v756 = vadd.f32 %v272, %v755
  %757 = vmatmul.f32.gmra.mxu0 %v550
  %v758 = vpop.f32.mrf.mxu0
  %v759 = vadd.f32 %v277, %v758
  %760 = vmatmul.f32.gmra.mxu0 %v553
  %v761 = vpop.f32.mrf.mxu0
  %v762 = vadd.f32 %v282, %v761
  %763 = vmatmul.f32.gmra.mxu0 %v556
  %v764 = vpop.f32.mrf.mxu0
  %v765 = vadd.f32 %v287, %v764
  %766 = vmatmul.f32.gmra.mxu0 %v559
  %v767 = vpop.f32.mrf.mxu0
  %v768 = vadd.f32 %v292, %v767
  %769 = vmatmul.f32.gmra.mxu0 %v562
  %v770 = vpop.f32.mrf.mxu0
  %v771 = vadd.f32 %v297, %v770
  %772 = vmatmul.f32.gmra.mxu0 %v565
  %v773 = vpop.f32.mrf.mxu0
  %v774 = vadd.f32 %v302, %v773
  %775 = vmatmul.f32.gmra.mxu0 %v568
  %v776 = vpop.f32.mrf.mxu0
  %v777 = vadd.f32 %v307, %v776
  %778 = vmatmul.f32.gmra.mxu0 %v571
  %v779 = vpop.f32.mrf.mxu0
  %v780 = vadd.f32 %v312, %v779
  %781 = vmatmul.f32.gmra.mxu0 %v574
  %v782 = vpop.f32.mrf.mxu0
  %v783 = vadd.f32 %v317, %v782
  %784 = vmatmul.f32.gmra.mxu0 %v577
  %v785 = vpop.f32.mrf.mxu0
  %v786 = vadd.f32 %v322, %v785
  %787 = vmatmul.f32.gmra.mxu0 %v580
  %v788 = vpop.f32.mrf.mxu0
  %v789 = vadd.f32 %v327, %v788
  %790 = vmatmul.f32.gmra.mxu0 %v583
  %v791 = vpop.f32.mrf.mxu0
  %v792 = vadd.f32 %v332, %v791
  %793 = vmatmul.f32.gmra.mxu0 %v586
  %v794 = vpop.f32.mrf.mxu0
  %v795 = vadd.f32 %v337, %v794
  %796 = vmatmul.f32.gmra.mxu0 %v589
  %v797 = vpop.f32.mrf.mxu0
  %v798 = vadd.f32 %v342, %v797
  %799 = vmatmul.f32.gmra.mxu0 %v592
  %v800 = vpop.f32.mrf.mxu0
  %v801 = vadd.f32 %v347, %v800
  %802 = vmatmul.f32.gmra.mxu0 %v595
  %v803 = vpop.f32.mrf.mxu0
  %v804 = vadd.f32 %v352, %v803
  %805 = vmatmul.f32.gmra.mxu0 %v598
  %v806 = vpop.f32.mrf.mxu0
  %v807 = vadd.f32 %v357, %v806
  %808 = vmatmul.f32.gmra.mxu0 %v601
  %v809 = vpop.f32.mrf.mxu0
  %v810 = vadd.f32 %v362, %v809
  %811 = vmatmul.f32.gmra.mxu0 %v604
  %v812 = vpop.f32.mrf.mxu0
  %v813 = vadd.f32 %v367, %v812
  %814 = vmatmul.f32.gmra.mxu0 %v607
  %v815 = vpop.f32.mrf.mxu0
  %v816 = vadd.f32 %v372, %v815
  %817 = vmatmul.f32.gmra.mxu0 %v610
  %v818 = vpop.f32.mrf.mxu0
  %v819 = vadd.f32 %v377, %v818
  %820 = vmatmul.f32.gmra.mxu0 %v613
  %v821 = vpop.f32.mrf.mxu0
  %v822 = vadd.f32 %v382, %v821
  %823 = vmatmul.f32.gmra.mxu0 %v616
  %v824 = vpop.f32.mrf.mxu0
  %v825 = vadd.f32 %v387, %v824
  %826 = vmatmul.f32.gmra.mxu0 %v619
  %v827 = vpop.f32.mrf.mxu0
  %v828 = vadd.f32 %v392, %v827
  %829 = vmatmul.f32.gmra.mxu0 %v622
  %v830 = vpop.f32.mrf.mxu0
  %v831 = vadd.f32 %v397, %v830
  %832 = vmatmul.f32.gmra.mxu0 %v625
  %v833 = vpop.f32.mrf.mxu0
  %v834 = vadd.f32 %v402, %v833
  %835 = vmatmul.f32.gmra.mxu0 %v628
  %v836 = vpop.f32.mrf.mxu0
  %v837 = vadd.f32 %v407, %v836
  %838 = vmatmul.f32.gmra.mxu0 %v631
  %v839 = vpop.f32.mrf.mxu0
  %v840 = vadd.f32 %v412, %v839
  %841 = vmatmul.f32.gmra.mxu0 %v634
  %v842 = vpop.f32.mrf.mxu0
  %v843 = vadd.f32 %v417, %v842
  %844 = vmatmul.f32.gmra.mxu0 %v637
  %v845 = vpop.f32.mrf.mxu0
  %v846 = vadd.f32 %v422, %v845
  %847 = vmatmul.f32.gmra.mxu0 %v640
  %v848 = vpop.f32.mrf.mxu0
  %v849 = vadd.f32 %v427, %v848
  %850 = vmatmul.f32.gmra.mxu0 %v643
  %v851 = vpop.f32.mrf.mxu0
  %v852 = vadd.f32 %v432, %v851
  %853 = vmatmul.f32.gmra.mxu0 %v646
  %v854 = vpop.f32.mrf.mxu0
  %v855 = vadd.f32 %v437, %v854
  %856 = vmatmul.f32.gmra.mxu0 %v649
  %v857 = vpop.f32.mrf.mxu0
  %v858 = vadd.f32 %v442, %v857
  %859 = vmatmul.f32.gmra.mxu0 %v652
  %v860 = vpop.f32.mrf.mxu0
  %v861 = vadd.f32 %v447, %v860
  %862 = vmatmul.f32.gmra.mxu0 %v655
  %v863 = vpop.f32.mrf.mxu0
  %v864 = vadd.f32 %v452, %v863
  %865 = vmatmul.f32.gmra.mxu0 %v658
  %v866 = vpop.f32.mrf.mxu0
  %v867 = vadd.f32 %v457, %v866
  %868 = vmatmul.f32.gmra.mxu0 %v661
  %v869 = vpop.f32.mrf.mxu0
  %v870 = vadd.f32 %v462, %v869
  %871 = vmatmul.f32.gmra.mxu0 %v664
  %v872 = vpop.f32.mrf.mxu0
  %v873 = vadd.f32 %v467, %v872
  %874 = vmatmul.f32.gmra.mxu0 %v667
  %v875 = vpop.f32.mrf.mxu0
  %v876 = vadd.f32 %v472, %v875
  %877 = vmatmul.f32.gmra.mxu0 %v670
  %v878 = vpop.f32.mrf.mxu0
  %v879 = vadd.f32 %v477, %v878
  %880 = vdwg.mxu0
  %v881 = vmax.f32 %v690, 0.0
  %v882 = vmax.f32 %v693, 0.0
  %v883 = vmax.f32 %v696, 0.0
  %v884 = vmax.f32 %v699, 0.0
  %v885 = vmax.f32 %v702, 0.0
  %v886 = vmax.f32 %v705, 0.0
  %v887 = vmax.f32 %v708, 0.0
  %v888 = vmax.f32 %v711, 0.0
  %v889 = vmax.f32 %v714, 0.0
  %v890 = vmax.f32 %v717, 0.0
  %v891 = vmax.f32 %v720, 0.0
  %v892 = vmax.f32 %v723, 0.0
  %v893 = vmax.f32 %v726, 0.0
  %v894 = vmax.f32 %v729, 0.0
  %v895 = vmax.f32 %v732, 0.0
  %v896 = vmax.f32 %v735, 0.0
  %v897 = vmax.f32 %v738, 0.0
  %v898 = vmax.f32 %v741, 0.0
  %v899 = vmax.f32 %v744, 0.0
  %v900 = vmax.f32 %v747, 0.0
  %v901 = vmax.f32 %v750, 0.0
  %v902 = vmax.f32 %v753, 0.0
  %v903 = vmax.f32 %v756, 0.0
  %v904 = vmax.f32 %v759, 0.0
  %v905 = vmax.f32 %v762, 0.0
  %v906 = vmax.f32 %v765, 0.0
  %v907 = vmax.f32 %v768, 0.0
  %v908 = vmax.f32 %v771, 0.0
  %v909 = vmax.f32 %v774, 0.0
  %v910 = vmax.f32 %v777, 0.0
  %v911 = vmax.f32 %v780, 0.0
  %v912 = vmax.f32 %v783, 0.0
  %v913 = vmax.f32 %v786, 0.0
  %v914 = vmax.f32 %v789, 0.0
  %v915 = vmax.f32 %v792, 0.0
  %v916 = vmax.f32 %v795, 0.0
  %v917 = vmax.f32 %v798, 0.0
  %v918 = vmax.f32 %v801, 0.0
  %v919 = vmax.f32 %v804, 0.0
  %v920 = vmax.f32 %v807, 0.0
  %v921 = vmax.f32 %v810, 0.0
  %v922 = vmax.f32 %v813, 0.0
  %v923 = vmax.f32 %v816, 0.0
  %v924 = vmax.f32 %v819, 0.0
  %v925 = vmax.f32 %v822, 0.0
  %v926 = vmax.f32 %v825, 0.0
  %v927 = vmax.f32 %v828, 0.0
  %v928 = vmax.f32 %v831, 0.0
  %v929 = vmax.f32 %v834, 0.0
  %v930 = vmax.f32 %v837, 0.0
  %v931 = vmax.f32 %v840, 0.0
  %v932 = vmax.f32 %v843, 0.0
  %v933 = vmax.f32 %v846, 0.0
  %v934 = vmax.f32 %v849, 0.0
  %v935 = vmax.f32 %v852, 0.0
  %v936 = vmax.f32 %v855, 0.0
  %v937 = vmax.f32 %v858, 0.0
  %v938 = vmax.f32 %v861, 0.0
  %v939 = vmax.f32 %v864, 0.0
  %v940 = vmax.f32 %v867, 0.0
  %v941 = vmax.f32 %v870, 0.0
  %v942 = vmax.f32 %v873, 0.0
  %v943 = vmax.f32 %v876, 0.0
  %v944 = vmax.f32 %v879, 0.0
  %v945 = vld [vmem:[%s3] sm:$0xff]
  %v946 = vld [vmem:[%s3 + $0x8] sm:$0xff]
  %v947 = vld [vmem:[%s3 + $0x10] sm:$0xff]
  %v948 = vld [vmem:[%s3 + $0x18] sm:$0xff]
  %v949 = vld [vmem:[%s3 + $0x20] sm:$0xff]
  %v950 = vld [vmem:[%s3 + $0x28] sm:$0xff]
  %v951 = vld [vmem:[%s3 + $0x30] sm:$0xff]
  %v952 = vld [vmem:[%s3 + $0x38] sm:$0xff]
  %v953 = vld [vmem:[%s3 + $0x40] sm:$0x3f]
  %v954 = vld [vmem:[%s3 + $0x48] sm:$0x3f]
  %v955 = vld [vmem:[%s3 + $0x50] sm:$0x3f]
  %v956 = vld [vmem:[%s3 + $0x58] sm:$0x3f]
  %v957 = vld [vmem:[%s4] sm:$0xff]
  %v958 = vld [vmem:[%s4 + $0x8] sm:$0xff]
  %v959 = vld [vmem:[%s4 + $0x10] sm:$0x3f]
  %961 = vset.pattern.permute.xlu0 0
  %962 = vperm.xlu0 %961, %v957
  %v963 = vpop.permute.xlu0 %962
  %966 = vset.pattern.permute.xlu0 0
  %967 = vperm.xlu0 %966, %v958
  %v968 = vpop.permute.xlu0 %967
  %971 = vset.pattern.permute.xlu0 0
  %972 = vperm.xlu0 %971, %v959
  %v973 = vpop.permute.xlu0 %972
  %975 = vmatpush.msra.mxu0 %v896
  %976 = vmatpush.msra.mxu0 %v895
  %977 = vmatpush.msra.mxu0 %v894
  %978 = vmatpush.msra.mxu0 %v893
  %979 = vmatpush.msra.mxu0 %v892
  %980 = vmatpush.msra.mxu0 %v891
  %981 = vmatpush.msra.mxu0 %v890
  %982 = vmatpush.msra.mxu0 %v889
  %983 = vmatpush.msra.mxu0 %v888
  %984 = vmatpush.msra.mxu0 %v887
  %985 = vmatpush.msra.mxu0 %v886
  %986 = vmatpush.msra.mxu0 %v885
  %987 = vmatpush.msra.mxu0 %v884
  %988 = vmatpush.msra.mxu0 %v883
  %989 = vmatpush.msra.mxu0 %v882
  %990 = vmatpush.msra.mxu0 %v881
  %991 = vmatmul.f32.gmra.mxu0 %v945
  %v992 = vpop.f32.mrf.mxu0
  %v993 = vadd.f32 %v963, %v992
  %994 = vmatmul.f32.gmra.mxu0 %v949
  %v995 = vpop.f32.mrf.mxu0
  %v996 = vadd.f32 %v968, %v995
  %997 = vmatmul.f32.gmra.mxu0 %v953
  %v998 = vpop.f32.mrf.mxu0
  %v999 = vadd.f32 %v973, %v998
  %1000 = vdwg.mxu0
  %1001 = vmatpush.msra.mxu0 %v912
  %1002 = vmatpush.msra.mxu0 %v911
  %1003 = vmatpush.msra.mxu0 %v910
  %1004 = vmatpush.msra.mxu0 %v909
  %1005 = vmatpush.msra.mxu0 %v908
  %1006 = vmatpush.msra.mxu0 %v907
  %1007 = vmatpush.msra.mxu0 %v906
  %1008 = vmatpush.msra.mxu0 %v905
  %1009 = vmatpush.msra.mxu0 %v904
  %1010 = vmatpush.msra.mxu0 %v903
  %1011 = vmatpush.msra.mxu0 %v902
  %1012 = vmatpush.msra.mxu0 %v901
  %1013 = vmatpush.msra.mxu0 %v900
  %1014 = vmatpush.msra.mxu0 %v899
  %1015 = vmatpush.msra.mxu0 %v898
  %1016 = vmatpush.msra.mxu0 %v897
  %1017 = vmatmul.f32.gmra.mxu0 %v946
  %v1018 = vpop.f32.mrf.mxu0
  %v1019 = vadd.f32 %v993, %v1018
  %1020 = vmatmul.f32.gmra.mxu0 %v950
  %v1021 = vpop.f32.mrf.mxu0
  %v1022 = vadd.f32 %v996, %v1021
  %1023 = vmatmul.f32.gmra.mxu0 %v954
  %v1024 = vpop.f32.mrf.mxu0
  %v1025 = vadd.f32 %v999, %v1024
  %1026 = vdwg.mxu0
  %1027 = vmatpush.msra.mxu0 %v928
  %1028 = vmatpush.msra.mxu0 %v927
  %1029 = vmatpush.msra.mxu0 %v926
  %1030 = vmatpush.msra.mxu0 %v925
  %1031 = vmatpush.msra.mxu0 %v924
  %1032 = vmatpush.msra.mxu0 %v923
  %1033 = vmatpush.msra.mxu0 %v922
  %1034 = vmatpush.msra.mxu0 %v921
  %1035 = vmatpush.msra.mxu0 %v920
  %1036 = vmatpush.msra.mxu0 %v919
  %1037 = vmatpush.msra.mxu0 %v918
  %1038 = vmatpush.msra.mxu0 %v917
  %1039 = vmatpush.msra.mxu0 %v916
  %1040 = vmatpush.msra.mxu0 %v915
  %1041 = vmatpush.msra.mxu0 %v914
  %1042 = vmatpush.msra.mxu0 %v913
  %1043 = vmatmul.f32.gmra.mxu0 %v947
  %v1044 = vpop.f32.mrf.mxu0
  %v1045 = vadd.f32 %v1019, %v1044
  %1046 = vmatmul.f32.gmra.mxu0 %v951
  %v1047 = vpop.f32.mrf.mxu0
  %v1048 = vadd.f32 %v1022, %v1047
  %1049 = vmatmul.f32.gmra.mxu0 %v955
  %v1050 = vpop.f32.mrf.mxu0
  %v1051 = vadd.f32 %v1025, %v1050
  %1052 = vdwg.mxu0
  %1053 = vmatpush.msra.mxu0 %v944
  %1054 = vmatpush.msra.mxu0 %v943
  %1055 = vmatpush.msra.mxu0 %v942
  %1056 = vmatpush.msra.mxu0 %v941
  %1057 = vmatpush.msra.mxu0 %v940
  %1058 = vmatpush.msra.mxu0 %v939
  %1059 = vmatpush.msra.mxu0 %v938
  %1060 = vmatpush.msra.mxu0 %v937
  %1061 = vmatpush.msra.mxu0 %v936
  %1062 = vmatpush.msra.mxu0 %v935
  %1063 = vmatpush.msra.mxu0 %v934
  %1064 = vmatpush.msra.mxu0 %v933
  %1065 = vmatpush.msra.mxu0 %v932
  %1066 = vmatpush.msra.mxu0 %v931
  %1067 = vmatpush.msra.mxu0 %v930
  %1068 = vmatpush.msra.mxu0 %v929
  %1069 = vmatmul.f32.gmra.mxu0 %v948
  %v1070 = vpop.f32.mrf.mxu0
  %v1071 = vadd.f32 %v1045, %v1070
  %1072 = vmatmul.f32.gmra.mxu0 %v952
  %v1073 = vpop.f32.mrf.mxu0
  %v1074 = vadd.f32 %v1048, %v1073
  %1075 = vmatmul.f32.gmra.mxu0 %v956
  %v1076 = vpop.f32.mrf.mxu0
  %v1077 = vadd.f32 %v1051, %v1076
  %1078 = vdwg.mxu0
  %v1079 = vld [vmem:[%s5] sm:$0xff]
  %v1080 = vld [vmem:[%s5 + $0x8] sm:$0xff]
  %v1081 = vld [vmem:[%s5 + $0x10] sm:$0xff]
  %v1082 = vld [vmem:[%s5 + $0x18] sm:$0xff]
  %v1083 = vld [vmem:[%s5 + $0x20] sm:$0xff]
  %v1084 = vld [vmem:[%s5 + $0x28] sm:$0xff]
  %v1085 = vld [vmem:[%s5 + $0x30] sm:$0xff]
  %v1086 = vld [vmem:[%s5 + $0x38] sm:$0xff]
  %v1087 = vld [vmem:[%s5 + $0x40] sm:$0xff]
  %v1088 = vld [vmem:[%s5 + $0x48] sm:$0xff]
  %v1089 = vld [vmem:[%s5 + $0x50] sm:$0xff]
  %v1090 = vld [vmem:[%s5 + $0x58] sm:$0xff]
  %v1091 = vld [vmem:[%s5 + $0x60] sm:$0xff]
  %v1092 = vld [vmem:[%s5 + $0x68] sm:$0xff]
  %v1093 = vld [vmem:[%s5 + $0x70] sm:$0xff]
  %v1094 = vld [vmem:[%s5 + $0x78] sm:$0xff]
  %v1095 = vld [vmem:[%s5 + $0x80] sm:$0xff]
  %v1096 = vld [vmem:[%s5 + $0x88] sm:$0xff]
  %v1097 = vld [vmem:[%s5 + $0x90] sm:$0xff]
  %v1098 = vld [vmem:[%s5 + $0x98] sm:$0xff]
  %v1099 = vld [vmem:[%s5 + $0xa0] sm:$0xff]
  %v1100 = vld [vmem:[%s5 + $0xa8] sm:$0xff]
  %v1101 = vld [vmem:[%s5 + $0xb0] sm:$0xff]
  %v1102 = vld [vmem:[%s5 + $0xb8] sm:$0xff]
  %v1103 = vld [vmem:[%s5 + $0xc0] sm:$0xff]
  %v1104 = vld [vmem:[%s5 + $0xc8] sm:$0xff]
  %v1105 = vld [vmem:[%s5 + $0xd0] sm:$0xff]
  %v1106 = vld [vmem:[%s5 + $0xd8] sm:$0xff]
  %v1107 = vld [vmem:[%s5 + $0xe0] sm:$0xff]
  %v1108 = vld [vmem:[%s5 + $0xe8] sm:$0xff]
  %v1109 = vld [vmem:[%s5 + $0xf0] sm:$0xff]
  %v1110 = vld [vmem:[%s5 + $0xf8] sm:$0xff]
  %v1111 = vld [vmem:[%s5 + $0x100] sm:$0xff]
  %v1112 = vld [vmem:[%s5 + $0x108] sm:$0xff]
  %v1113 = vld [vmem:[%s5 + $0x110] sm:$0xff]
  %v1114 = vld [vmem:[%s5 + $0x118] sm:$0xff]
  %v1115 = vld [vmem:[%s5 + $0x120] sm:$0xff]
  %v1116 = vld [vmem:[%s5 + $0x128] sm:$0xff]
  %v1117 = vld [vmem:[%s5 + $0x130] sm:$0xff]
  %v1118 = vld [vmem:[%s5 + $0x138] sm:$0xff]
  %v1119 = vld [vmem:[%s5 + $0x140] sm:$0xff]
  %v1120 = vld [vmem:[%s5 + $0x148] sm:$0xff]
  %v1121 = vld [vmem:[%s5 + $0x150] sm:$0xff]
  %v1122 = vld [vmem:[%s5 + $0x158] sm:$0xff]
  %v1123 = vld [vmem:[%s5 + $0x160] sm:$0xff]
  %v1124 = vld [vmem:[%s5 + $0x168] sm:$0xff]
  %v1125 = vld [vmem:[%s5 + $0x170] sm:$0xff]
  %v1126 = vld [vmem:[%s5 + $0x178] sm:$0xff]
  %v1127 = vld [vmem:[%s5 + $0x180] sm:$0xff]
  %v1128 = vld [vmem:[%s5 + $0x188] sm:$0xff]
  %v1129 = vld [vmem:[%s5 + $0x190] sm:$0xff]
  %v1130 = vld [vmem:[%s5 + $0x198] sm:$0xff]
  %v1131 = vld [vmem:[%s5 + $0x1a0] sm:$0xff]
  %v1132 = vld [vmem:[%s5 + $0x1a8] sm:$0xff]
  %v1133 = vld [vmem:[%s5 + $0x1b0] sm:$0xff]
  %v1134 = vld [vmem:[%s5 + $0x1b8] sm:$0xff]
  %v1135 = vld [vmem:[%s5 + $0x1c0] sm:$0xff]
  %v1136 = vld [vmem:[%s5 + $0x1c8] sm:$0xff]
  %v1137 = vld [vmem:[%s5 + $0x1d0] sm:$0xff]
  %v1138 = vld [vmem:[%s5 + $0x1d8] sm:$0xff]
  %v1139 = vld [vmem:[%s5 + $0x1e0] sm:$0xff]
  %v1140 = vld [vmem:[%s5 + $0x1e8] sm:$0xff]
  %v1141 = vld [vmem:[%s5 + $0x1f0] sm:$0xff]
  %v1142 = vld [vmem:[%s5 + $0x1f8] sm:$0xff]
  %vm1143 = vcmask 523264
  %v1145 = vsel %vm1143, %v1071, 0
  %v1148 = vsel %vm1143, %v1074, 0
  %v1151 = vsel %vm1143, %v1077, 0
  %1153 = vmatpush.msra.mxu0 0.0
  %1154 = vmatpush.msra.mxu0 0.0
  %1155 = vmatpush.msra.mxu0 0.0
  %1156 = vmatpush.msra.mxu0 0.0
  %1157 = vmatpush.msra.mxu0 0.0
  %1158 = vmatpush.msra.mxu0 0.0
  %1159 = vmatpush.msra.mxu0 0.0
  %1160 = vmatpush.msra.mxu0 0.0
  %1161 = vmatpush.msra.mxu0 %v1135
  %1162 = vmatpush.msra.mxu0 %v1127
  %1163 = vmatpush.msra.mxu0 %v1119
  %1164 = vmatpush.msra.mxu0 %v1111
  %1165 = vmatpush.msra.mxu0 %v1103
  %1166 = vmatpush.msra.mxu0 %v1095
  %1167 = vmatpush.msra.mxu0 %v1087
  %1168 = vmatpush.msra.mxu0 %v1079
  %1169 = vmatmul.f32.gmra.mxu0 %v1145
  %v1170 = vpop.f32.mrf.mxu0
  %v1171 = vadd.f32 0.0, %v1170
  %1172 = vmatmul.f32.gmra.mxu0 %v1148
  %v1173 = vpop.f32.mrf.mxu0
  %v1174 = vadd.f32 0.0, %v1173
  %1175 = vmatmul.f32.gmra.mxu0 %v1151
  %v1176 = vpop.f32.mrf.mxu0
  %v1177 = vadd.f32 0.0, %v1176
  %1178 = vdwg.mxu0
  %1179 = vmatpush.msra.mxu0 0.0
  %1180 = vmatpush.msra.mxu0 0.0
  %1181 = vmatpush.msra.mxu0 0.0
  %1182 = vmatpush.msra.mxu0 0.0
  %1183 = vmatpush.msra.mxu0 0.0
  %1184 = vmatpush.msra.mxu0 0.0
  %1185 = vmatpush.msra.mxu0 0.0
  %1186 = vmatpush.msra.mxu0 0.0
  %1187 = vmatpush.msra.mxu0 %v1136
  %1188 = vmatpush.msra.mxu0 %v1128
  %1189 = vmatpush.msra.mxu0 %v1120
  %1190 = vmatpush.msra.mxu0 %v1112
  %1191 = vmatpush.msra.mxu0 %v1104
  %1192 = vmatpush.msra.mxu0 %v1096
  %1193 = vmatpush.msra.mxu0 %v1088
  %1194 = vmatpush.msra.mxu0 %v1080
  %1195 = vmatmul.f32.gmra.mxu0 %v1145
  %v1196 = vpop.f32.mrf.mxu0
  %v1197 = vadd.f32 0.0, %v1196
  %1198 = vmatmul.f32.gmra.mxu0 %v1148
  %v1199 = vpop.f32.mrf.mxu0
  %v1200 = vadd.f32 0.0, %v1199
  %1201 = vmatmul.f32.gmra.mxu0 %v1151
  %v1202 = vpop.f32.mrf.mxu0
  %v1203 = vadd.f32 0.0, %v1202
  %1204 = vdwg.mxu0
  %1205 = vmatpush.msra.mxu0 0.0
  %1206 = vmatpush.msra.mxu0 0.0
  %1207 = vmatpush.msra.mxu0 0.0
  %1208 = vmatpush.msra.mxu0 0.0
  %1209 = vmatpush.msra.mxu0 0.0
  %1210 = vmatpush.msra.mxu0 0.0
  %1211 = vmatpush.msra.mxu0 0.0
  %1212 = vmatpush.msra.mxu0 0.0
  %1213 = vmatpush.msra.mxu0 %v1137
  %1214 = vmatpush.msra.mxu0 %v1129
  %1215 = vmatpush.msra.mxu0 %v1121
  %1216 = vmatpush.msra.mxu0 %v1113
  %1217 = vmatpush.msra.mxu0 %v1105
  %1218 = vmatpush.msra.mxu0 %v1097
  %1219 = vmatpush.msra.mxu0 %v1089
  %1220 = vmatpush.msra.mxu0 %v1081
  %1221 = vmatmul.f32.gmra.mxu0 %v1145
  %v1222 = vpop.f32.mrf.mxu0
  %v1223 = vadd.f32 0.0, %v1222
  %1224 = vmatmul.f32.gmra.mxu0 %v1148
  %v1225 = vpop.f32.mrf.mxu0
  %v1226 = vadd.f32 0.0, %v1225
  %1227 = vmatmul.f32.gmra.mxu0 %v1151
  %v1228 = vpop.f32.mrf.mxu0
  %v1229 = vadd.f32 0.0, %v1228
  %1230 = vdwg.mxu0
  %1231 = vmatpush.msra.mxu0 0.0
  %1232 = vmatpush.msra.mxu0 0.0
  %1233 = vmatpush.msra.mxu0 0.0
  %1234 = vmatpush.msra.mxu0 0.0
  %1235 = vmatpush.msra.mxu0 0.0
  %1236 = vmatpush.msra.mxu0 0.0
  %1237 = vmatpush.msra.mxu0 0.0
  %1238 = vmatpush.msra.mxu0 0.0
  %1239 = vmatpush.msra.mxu0 %v1138
  %1240 = vmatpush.msra.mxu0 %v1130
  %1241 = vmatpush.msra.mxu0 %v1122
  %1242 = vmatpush.msra.mxu0 %v1114
  %1243 = vmatpush.msra.mxu0 %v1106
  %1244 = vmatpush.msra.mxu0 %v1098
  %1245 = vmatpush.msra.mxu0 %v1090
  %1246 = vmatpush.msra.mxu0 %v1082
  %1247 = vmatmul.f32.gmra.mxu0 %v1145
  %v1248 = vpop.f32.mrf.mxu0
  %v1249 = vadd.f32 0.0, %v1248
  %1250 = vmatmul.f32.gmra.mxu0 %v1148
  %v1251 = vpop.f32.mrf.mxu0
  %v1252 = vadd.f32 0.0, %v1251
  %1253 = vmatmul.f32.gmra.mxu0 %v1151
  %v1254 = vpop.f32.mrf.mxu0
  %v1255 = vadd.f32 0.0, %v1254
  %1256 = vdwg.mxu0
  %1257 = vmatpush.msra.mxu0 0.0
  %1258 = vmatpush.msra.mxu0 0.0
  %1259 = vmatpush.msra.mxu0 0.0
  %1260 = vmatpush.msra.mxu0 0.0
  %1261 = vmatpush.msra.mxu0 0.0
  %1262 = vmatpush.msra.mxu0 0.0
  %1263 = vmatpush.msra.mxu0 0.0
  %1264 = vmatpush.msra.mxu0 0.0
  %1265 = vmatpush.msra.mxu0 %v1139
  %1266 = vmatpush.msra.mxu0 %v1131
  %1267 = vmatpush.msra.mxu0 %v1123
  %1268 = vmatpush.msra.mxu0 %v1115
  %1269 = vmatpush.msra.mxu0 %v1107
  %1270 = vmatpush.msra.mxu0 %v1099
  %1271 = vmatpush.msra.mxu0 %v1091
  %1272 = vmatpush.msra.mxu0 %v1083
  %1273 = vmatmul.f32.gmra.mxu0 %v1145
  %v1274 = vpop.f32.mrf.mxu0
  %v1275 = vadd.f32 0.0, %v1274
  %1276 = vmatmul.f32.gmra.mxu0 %v1148
  %v1277 = vpop.f32.mrf.mxu0
  %v1278 = vadd.f32 0.0, %v1277
  %1279 = vmatmul.f32.gmra.mxu0 %v1151
  %v1280 = vpop.f32.mrf.mxu0
  %v1281 = vadd.f32 0.0, %v1280
  %1282 = vdwg.mxu0
  %1283 = vmatpush.msra.mxu0 0.0
  %1284 = vmatpush.msra.mxu0 0.0
  %1285 = vmatpush.msra.mxu0 0.0
  %1286 = vmatpush.msra.mxu0 0.0
  %1287 = vmatpush.msra.mxu0 0.0
  %1288 = vmatpush.msra.mxu0 0.0
  %1289 = vmatpush.msra.mxu0 0.0
  %1290 = vmatpush.msra.mxu0 0.0
  %1291 = vmatpush.msra.mxu0 %v1140
  %1292 = vmatpush.msra.mxu0 %v1132
  %1293 = vmatpush.msra.mxu0 %v1124
  %1294 = vmatpush.msra.mxu0 %v1116
  %1295 = vmatpush.msra.mxu0 %v1108
  %1296 = vmatpush.msra.mxu0 %v1100
  %1297 = vmatpush.msra.mxu0 %v1092
  %1298 = vmatpush.msra.mxu0 %v1084
  %1299 = vmatmul.f32.gmra.mxu0 %v1145
  %v1300 = vpop.f32.mrf.mxu0
  %v1301 = vadd.f32 0.0, %v1300
  %1302 = vmatmul.f32.gmra.mxu0 %v1148
  %v1303 = vpop.f32.mrf.mxu0
  %v1304 = vadd.f32 0.0, %v1303
  %1305 = vmatmul.f32.gmra.mxu0 %v1151
  %v1306 = vpop.f32.mrf.mxu0
  %v1307 = vadd.f32 0.0, %v1306
  %1308 = vdwg.mxu0
  %1309 = vmatpush.msra.mxu0 0.0
  %1310 = vmatpush.msra.mxu0 0.0
  %1311 = vmatpush.msra.mxu0 0.0
  %1312 = vmatpush.msra.mxu0 0.0
  %1313 = vmatpush.msra.mxu0 0.0
  %1314 = vmatpush.msra.mxu0 0.0
  %1315 = vmatpush.msra.mxu0 0.0
  %1316 = vmatpush.msra.mxu0 0.0
  %1317 = vmatpush.msra.mxu0 %v1141
  %1318 = vmatpush.msra.mxu0 %v1133
  %1319 = vmatpush.msra.mxu0 %v1125
  %1320 = vmatpush.msra.mxu0 %v1117
  %1321 = vmatpush.msra.mxu0 %v1109
  %1322 = vmatpush.msra.mxu0 %v1101
  %1323 = vmatpush.msra.mxu0 %v1093
  %1324 = vmatpush.msra.mxu0 %v1085
  %1325 = vmatmul.f32.gmra.mxu0 %v1145
  %v1326 = vpop.f32.mrf.mxu0
  %v1327 = vadd.f32 0.0, %v1326
  %1328 = vmatmul.f32.gmra.mxu0 %v1148
  %v1329 = vpop.f32.mrf.mxu0
  %v1330 = vadd.f32 0.0, %v1329
  %1331 = vmatmul.f32.gmra.mxu0 %v1151
  %v1332 = vpop.f32.mrf.mxu0
  %v1333 = vadd.f32 0.0, %v1332
  %1334 = vdwg.mxu0
  %1335 = vmatpush.msra.mxu0 0.0
  %1336 = vmatpush.msra.mxu0 0.0
  %1337 = vmatpush.msra.mxu0 0.0
  %1338 = vmatpush.msra.mxu0 0.0
  %1339 = vmatpush.msra.mxu0 0.0
  %1340 = vmatpush.msra.mxu0 0.0
  %1341 = vmatpush.msra.mxu0 0.0
  %1342 = vmatpush.msra.mxu0 0.0
  %1343 = vmatpush.msra.mxu0 %v1142
  %1344 = vmatpush.msra.mxu0 %v1134
  %1345 = vmatpush.msra.mxu0 %v1126
  %1346 = vmatpush.msra.mxu0 %v1118
  %1347 = vmatpush.msra.mxu0 %v1110
  %1348 = vmatpush.msra.mxu0 %v1102
  %1349 = vmatpush.msra.mxu0 %v1094
  %1350 = vmatpush.msra.mxu0 %v1086
  %1351 = vmatmul.f32.gmra.mxu0 %v1145
  %v1352 = vpop.f32.mrf.mxu0
  %v1353 = vadd.f32 0.0, %v1352
  %1354 = vmatmul.f32.gmra.mxu0 %v1148
  %v1355 = vpop.f32.mrf.mxu0
  %v1356 = vadd.f32 0.0, %v1355
  %1357 = vmatmul.f32.gmra.mxu0 %v1151
  %v1358 = vpop.f32.mrf.mxu0
  %v1359 = vadd.f32 0.0, %v1358
  %1360 = vdwg.mxu0
  %v1361 = vmax.f32 %v1171, %v1223
  %v1362 = vmax.f32 %v1197, %v1249
  %v1363 = vmax.f32 %v1361, %v1275
  %v1364 = vmax.f32 %v1362, %v1301
  %v1365 = vmax.f32 %v1363, %v1327
  %v1366 = vmax.f32 %v1364, %v1353
  %v1367 = vmax.f32 %v1365, %v1366
  %1368 = vmax.xlane.f32.xlu0 %v1367
  %v1369 = vpop.xlane.xlu0 %1368
  %v1370 = vmax.f32 %v1174, %v1226
  %v1371 = vmax.f32 %v1200, %v1252
  %v1372 = vmax.f32 %v1370, %v1278
  %v1373 = vmax.f32 %v1371, %v1304
  %v1374 = vmax.f32 %v1372, %v1330
  %v1375 = vmax.f32 %v1373, %v1356
  %v1376 = vmax.f32 %v1374, %v1375
  %1377 = vmax.xlane.f32.xlu0 %v1376
  %v1378 = vpop.xlane.xlu0 %1377
  %vm1379 = vcmask 1045504
  %v1380 = vsel %vm1379, %v1177, -inf
  %v1381 = vsel %vm1379, %v1203, -inf
  %v1382 = vsel %vm1379, %v1229, -inf
  %v1383 = vmax.f32 %v1380, %v1382
  %v1384 = vsel %vm1379, %v1255, -inf
  %v1385 = vmax.f32 %v1381, %v1384
  %v1386 = vsel %vm1379, %v1281, -inf
  %v1387 = vmax.f32 %v1383, %v1386
  %v1388 = vsel %vm1379, %v1307, -inf
  %v1389 = vmax.f32 %v1385, %v1388
  %v1390 = vsel %vm1379, %v1333, -inf
  %v1391 = vmax.f32 %v1387, %v1390
  %v1392 = vsel %vm1379, %v1359, -inf
  %v1393 = vmax.f32 %v1389, %v1392
  %v1394 = vmax.f32 %v1391, %v1393
  %1395 = vmax.xlane.f32.xlu0 %v1394
  %v1396 = vpop.xlane.xlu0 %1395
  %v1397 = vlaneseq
  %v1398 = vand.u32 %v1397, 127
  %v1399 = vadd.s32 %v1398, 128
  %v1400 = vadd.s32 %v1398, 256
  %v1401 = vadd.s32 %v1398, 384
  %v1402 = vadd.s32 %v1398, 512
  %v1403 = vadd.s32 %v1398, 640
  %v1404 = vadd.s32 %v1398, 768
  %v1405 = vadd.s32 %v1398, 896
  %vm1406 = vcmp.ge.f32.partialorder %v1171, %v1369
  %vm1407 = vcmp.ge.f32.partialorder %v1197, %v1369
  %vm1408 = vcmp.ge.f32.partialorder %v1223, %v1369
  %vm1409 = vcmp.ge.f32.partialorder %v1249, %v1369
  %vm1410 = vcmp.ge.f32.partialorder %v1275, %v1369
  %vm1411 = vcmp.ge.f32.partialorder %v1301, %v1369
  %vm1412 = vcmp.ge.f32.partialorder %v1327, %v1369
  %vm1413 = vcmp.ge.f32.partialorder %v1353, %v1369
  %vm1414 = vcmp.ge.f32.partialorder %v1174, %v1378
  %vm1415 = vcmp.ge.f32.partialorder %v1200, %v1378
  %vm1416 = vcmp.ge.f32.partialorder %v1226, %v1378
  %vm1417 = vcmp.ge.f32.partialorder %v1252, %v1378
  %vm1418 = vcmp.ge.f32.partialorder %v1278, %v1378
  %vm1419 = vcmp.ge.f32.partialorder %v1304, %v1378
  %vm1420 = vcmp.ge.f32.partialorder %v1330, %v1378
  %vm1421 = vcmp.ge.f32.partialorder %v1356, %v1378
  %vm1422 = vcmp.ge.f32.partialorder %v1177, %v1396
  %vm1423 = vcmp.ge.f32.partialorder %v1203, %v1396
  %vm1424 = vcmp.ge.f32.partialorder %v1229, %v1396
  %vm1425 = vcmp.ge.f32.partialorder %v1255, %v1396
  %vm1426 = vcmp.ge.f32.partialorder %v1281, %v1396
  %vm1427 = vcmp.ge.f32.partialorder %v1307, %v1396
  %vm1428 = vcmp.ge.f32.partialorder %v1333, %v1396
  %vm1429 = vcmp.ge.f32.partialorder %v1359, %v1396
  %v1430 = vsel %vm1406, %v1398, 1024
  %v1431 = vsel %vm1407, %v1399, 1024
  %v1432 = vsel %vm1408, %v1400, 1024
  %v1433 = vsel %vm1409, %v1401, 1024
  %v1434 = vsel %vm1410, %v1402, 1024
  %v1435 = vsel %vm1411, %v1403, 1024
  %v1436 = vsel %vm1412, %v1404, 1024
  %v1437 = vsel %vm1413, %v1405, 1024
  %v1438 = vsel %vm1414, %v1398, 1024
  %v1439 = vsel %vm1415, %v1399, 1024
  %v1440 = vsel %vm1416, %v1400, 1024
  %v1441 = vsel %vm1417, %v1401, 1024
  %v1442 = vsel %vm1418, %v1402, 1024
  %v1443 = vsel %vm1419, %v1403, 1024
  %v1444 = vsel %vm1420, %v1404, 1024
  %v1445 = vsel %vm1421, %v1405, 1024
  %v1446 = vsel %vm1422, %v1398, 1024
  %v1447 = vsel %vm1423, %v1399, 1024
  %v1448 = vsel %vm1424, %v1400, 1024
  %v1449 = vsel %vm1425, %v1401, 1024
  %v1450 = vsel %vm1426, %v1402, 1024
  %v1451 = vsel %vm1427, %v1403, 1024
  %v1452 = vsel %vm1428, %v1404, 1024
  %v1453 = vsel %vm1429, %v1405, 1024
  %vm1454 = vcmp.lt.s32.totalorder %v1430, %v1432
  %v1455 = vsel %vm1454, %v1430, %v1432
  %vm1456 = vcmp.lt.s32.totalorder %v1431, %v1433
  %v1457 = vsel %vm1456, %v1431, %v1433
  %vm1458 = vcmp.lt.s32.totalorder %v1455, %v1434
  %v1459 = vsel %vm1458, %v1455, %v1434
  %vm1460 = vcmp.lt.s32.totalorder %v1457, %v1435
  %v1461 = vsel %vm1460, %v1457, %v1435
  %vm1462 = vcmp.lt.s32.totalorder %v1459, %v1436
  %v1463 = vsel %vm1462, %v1459, %v1436
  %vm1464 = vcmp.lt.s32.totalorder %v1461, %v1437
  %v1465 = vsel %vm1464, %v1461, %v1437
  %vm1466 = vcmp.lt.s32.totalorder %v1463, %v1465
  %v1467 = vsel %vm1466, %v1463, %v1465
  %v1468 = vand.u32 %v1467, 65535
  %v1469 = vshra.s32 %v1467, 16
  %v1470 = vcvt.s32.f32 %v1468
  %v1471 = vcvt.s32.f32 %v1469
  %1472 = vmin.xlane.f32.xlu0 %v1471
  %v1473 = vpop.xlane.xlu0 %1472
  %vm1474 = vcmp.eq.f32.partialorder %v1471, %v1473
  %v1475 = vsel %vm1474, %v1470, inf
  %1476 = vmin.xlane.f32.xlu0 %v1475
  %v1477 = vpop.xlane.xlu0 %1476
  %v1478 = vcvt.f32.s32 %v1477
  %v1479 = vcvt.f32.s32 %v1473
  %v1480 = vshll.u32 %v1479, 16
  %v1481 = vadd.s32 %v1480, %v1478
  %vm1482 = vcmp.lt.s32.totalorder %v1438, %v1440
  %v1483 = vsel %vm1482, %v1438, %v1440
  %vm1484 = vcmp.lt.s32.totalorder %v1439, %v1441
  %v1485 = vsel %vm1484, %v1439, %v1441
  %vm1486 = vcmp.lt.s32.totalorder %v1483, %v1442
  %v1487 = vsel %vm1486, %v1483, %v1442
  %vm1488 = vcmp.lt.s32.totalorder %v1485, %v1443
  %v1489 = vsel %vm1488, %v1485, %v1443
  %vm1490 = vcmp.lt.s32.totalorder %v1487, %v1444
  %v1491 = vsel %vm1490, %v1487, %v1444
  %vm1492 = vcmp.lt.s32.totalorder %v1489, %v1445
  %v1493 = vsel %vm1492, %v1489, %v1445
  %vm1494 = vcmp.lt.s32.totalorder %v1491, %v1493
  %v1495 = vsel %vm1494, %v1491, %v1493
  %v1496 = vand.u32 %v1495, 65535
  %v1497 = vshra.s32 %v1495, 16
  %v1498 = vcvt.s32.f32 %v1496
  %v1499 = vcvt.s32.f32 %v1497
  %1500 = vmin.xlane.f32.xlu0 %v1499
  %v1501 = vpop.xlane.xlu0 %1500
  %vm1502 = vcmp.eq.f32.partialorder %v1499, %v1501
  %v1503 = vsel %vm1502, %v1498, inf
  %1504 = vmin.xlane.f32.xlu0 %v1503
  %v1505 = vpop.xlane.xlu0 %1504
  %v1506 = vcvt.f32.s32 %v1505
  %v1507 = vcvt.f32.s32 %v1501
  %v1508 = vshll.u32 %v1507, 16
  %v1509 = vadd.s32 %v1508, %v1506
  %v1510 = vsel %vm1379, %v1446, 2147483647
  %v1511 = vsel %vm1379, %v1447, 2147483647
  %v1512 = vsel %vm1379, %v1448, 2147483647
  %vm1513 = vcmp.lt.s32.totalorder %v1510, %v1512
  %v1514 = vsel %vm1513, %v1510, %v1512
  %v1515 = vsel %vm1379, %v1449, 2147483647
  %vm1516 = vcmp.lt.s32.totalorder %v1511, %v1515
  %v1517 = vsel %vm1516, %v1511, %v1515
  %v1518 = vsel %vm1379, %v1450, 2147483647
  %vm1519 = vcmp.lt.s32.totalorder %v1514, %v1518
  %v1520 = vsel %vm1519, %v1514, %v1518
  %v1521 = vsel %vm1379, %v1451, 2147483647
  %vm1522 = vcmp.lt.s32.totalorder %v1517, %v1521
  %v1523 = vsel %vm1522, %v1517, %v1521
  %v1524 = vsel %vm1379, %v1452, 2147483647
  %vm1525 = vcmp.lt.s32.totalorder %v1520, %v1524
  %v1526 = vsel %vm1525, %v1520, %v1524
  %v1527 = vsel %vm1379, %v1453, 2147483647
  %vm1528 = vcmp.lt.s32.totalorder %v1523, %v1527
  %v1529 = vsel %vm1528, %v1523, %v1527
  %vm1530 = vcmp.lt.s32.totalorder %v1526, %v1529
  %v1531 = vsel %vm1530, %v1526, %v1529
  %v1532 = vand.u32 %v1531, 65535
  %v1533 = vshra.s32 %v1531, 16
  %v1534 = vcvt.s32.f32 %v1532
  %v1535 = vcvt.s32.f32 %v1533
  %1536 = vmin.xlane.f32.xlu0 %v1535
  %v1537 = vpop.xlane.xlu0 %1536
  %vm1538 = vcmp.eq.f32.partialorder %v1535, %v1537
  %v1539 = vsel %vm1538, %v1534, inf
  %1540 = vmin.xlane.f32.xlu0 %v1539
  %v1541 = vpop.xlane.xlu0 %1540
  %v1542 = vcvt.f32.s32 %v1541
  %v1543 = vcvt.f32.s32 %v1537
  %v1544 = vshll.u32 %v1543, 16
  %v1545 = vadd.s32 %v1544, %v1542
  %vm1546 = vcmask 7168
  %1547 = vst.msk [vmem:[%s6] sm:$0xff] %vm1546, %v1481
  %1548 = vst.msk [vmem:[%s6 + $0x8] sm:$0xff] %vm1546, %v1509
  %vm1549 = vcmask 5120
  %1550 = vst.msk [vmem:[%s6 + $0x10] sm:$0x3f] %vm1549, %v1545
  // Predicated region
  $region26: #{keypoint_forward.1} parent=0 // pred_check
    _
  $region27: #{keypoint_forward.1} parent=0 // pred_check_branch
    %1552 = sbr.rel (0) target = $region29
  $region28: #{keypoint_forward.1} parent=0 // pred_region
    _
  $region29: #{keypoint_forward.1} parent=0 // pred_fallthru
    _
  // Predicated region
  $region30: #{keypoint_forward.1} parent=0 // pred_check
    _
  $region31: #{keypoint_forward.1} parent=0 // pred_check_branch
    %1554 = sbr.rel (0) target = $region33
  $region32: #{keypoint_forward.1} parent=0 // pred_region
    _
  $region33: #{keypoint_forward.1} parent=0 // pred_fallthru
    _

</llo_original>
